<compile_context>
chip_gen: v5e
topology: v5e:2x2
jax: 0.10.0
libtpu: 0.0.40
codegen_flags: <defaults>
</compile_context>

<pallas_src>
import functools

import jax
import jax.numpy as jnp
from jax import lax
from jax.experimental import pallas as pl
from jax.experimental.pallas import tpu as pltpu


def _capsule_kernel(x_ref, w_ref, mask_ref, v_ref, *, n_iterations):
    """Dynamic routing for one batch tile.

    x_ref:    (I, TB, C)  inputs (batch tile on the sublane axis)
    w_ref:    (I, C, JK)  capsule transform, JK = out_units * out_channels
    mask_ref: (JK, JK)    block-diagonal ones: 1 iff same output capsule j
    v_ref:    (TB, JK)    output capsules, lane-dense flat layout
    """
    x = x_ref[...]
    w = w_ref[...]
    mask = mask_ref[...]

    # u[i, b, :] = x[i, b, :] @ W[i]   -- batched over in_units on the MXU.
    u = jnp.einsum("ibc,icm->ibm", x, w,
                   preferred_element_type=jnp.float32)        # [I, TB, JK]
    in_units, tb, jk = u.shape

    # Routing logits, kept replicated across the K lanes of each capsule
    # block: b_rep[i, b, j*K + k] == b[i, b, j] for every k.  This keeps the
    # entire routing loop lane-dense.
    b_rep = jnp.zeros((in_units, tb, jk), jnp.float32)
    v = jnp.zeros((tb, jk), jnp.float32)

    for _ in range(n_iterations):
        # softmax over in_units (leading axis -> cheap vreg-wise reduce);
        # lane replication is preserved since equal lanes stay equal.
        b_max = jnp.max(b_rep, axis=0, keepdims=True)
        e = jnp.exp(b_rep - b_max)
        c = e / jnp.sum(e, axis=0, keepdims=True)             # [I, TB, JK]

        # s[b, j, :] = sum_i c[b, i, j] * u[b, i, j, :]
        s = jnp.sum(c * u, axis=0)                            # [TB, JK]

        # |s_j|^2, replicated over each capsule's K lanes: segmented lane
        # reduction via the block-diagonal mask on the MXU (stays lane-dense).
        ns = lax.dot_general(s * s, mask,
                             dimension_numbers=(((1,), (0,)), ((), ())),
                             preferred_element_type=jnp.float32)   # [TB, JK]

        # squash: v = s*|s|^2/((1+|s|^2)*|s|) == s*|s|/(1+|s|^2)
        v = s * jnp.sqrt(ns) / (1.0 + ns)                     # [TB, JK]

        # agreement: b[b, i, j] += sum_k u[b, i, j, k] * v[b, j, k]
        # (same segmented lane reduction, batched over (i, b) on sublanes)
        t = (u * v[None, :, :]).reshape(in_units * tb, jk)
        upd = lax.dot_general(t, mask,
                              dimension_numbers=(((1,), (0,)), ((), ())),
                              preferred_element_type=jnp.float32)
        b_rep = b_rep + upd.reshape(in_units, tb, jk)

    v_ref[...] = v.astype(v_ref.dtype)


def capsule_layer(x, W, *, out_units, out_channels, n_iterations,
                  batch_tile=8):
    """x: [B, in_units, in_channels]; W: [in_units, in_channels, out_units*out_channels]."""
    bsz, in_units, in_channels = x.shape
    jk = out_units * out_channels
    assert W.shape == (in_units, in_channels, jk)
    assert batch_tile % 8 == 0, "batch tile must fill sublanes"

    # Wrapper-side layout plumbing (free): batch on the sublane axis, padded
    # up to a multiple of the batch tile (padded rows are zeros -> v == 0).
    n_blocks = pl.cdiv(bsz, batch_tile)
    b_pad = n_blocks * batch_tile
    x_t = jnp.transpose(x, (1, 0, 2)).astype(jnp.float32)     # [I, B, C]
    if b_pad != bsz:
        x_t = jnp.pad(x_t, ((0, 0), (0, b_pad - bsz), (0, 0)))

    # Block-diagonal "same output capsule" mask used for segmented reductions
    # along the lane axis inside the kernel.
    cap_id = jnp.arange(jk, dtype=jnp.int32) // out_channels
    mask = (cap_id[:, None] == cap_id[None, :]).astype(jnp.float32)

    kernel = functools.partial(_capsule_kernel, n_iterations=n_iterations)

    out_flat = pl.pallas_call(
        kernel,
        out_shape=jax.ShapeDtypeStruct((b_pad, jk), jnp.float32),
        grid_spec=pltpu.PrefetchScalarGridSpec(
            num_scalar_prefetch=0,
            grid=(n_blocks,),
            in_specs=[
                pl.BlockSpec((in_units, batch_tile, in_channels),
                             lambda b: (0, b, 0)),
                # Constant block index: W / mask are DMA'd once, not per step.
                pl.BlockSpec((in_units, in_channels, jk), lambda b: (0, 0, 0)),
                pl.BlockSpec((jk, jk), lambda b: (0, 0)),
            ],
            out_specs=pl.BlockSpec((batch_tile, jk), lambda b: (b, 0)),
        ),
        compiler_params=pltpu.CompilerParams(
            dimension_semantics=("parallel",),
            vmem_limit_bytes=32 * 1024 * 1024,
        ),
    )(x_t, W.astype(jnp.float32), mask)

    return out_flat[:bsz].reshape(bsz, out_units, out_channels)


def capsule_layer_ref(x, W, *, out_units, out_channels, n_iterations):
    """Pure-JAX reference matching the PyTorch forward."""
    bsz, in_units, _ = x.shape
    u = jnp.einsum("bic,icd->bid", x, W,
                   precision=jax.lax.Precision.HIGHEST).reshape(
        bsz, in_units, out_units, out_channels)
    b_log = jnp.zeros((bsz, in_units, out_units), jnp.float32)
    v = None
    for _ in range(n_iterations):
        c = jax.nn.softmax(b_log, axis=1)
        s = jnp.sum(c[..., None] * u, axis=1)
        n2 = jnp.sum(s * s, axis=-1, keepdims=True)
        n = jnp.sqrt(n2)
        v = s * n2 / ((1.0 + n2) * n)
        b_log = b_log + jnp.sum(u * v[:, None, :, :], axis=-1)
    return v


if __name__ == "__main__":
    # Small shapes consistent with the module's forward.
    batch = 16               # 2 grid steps of 8 -> exercises the pipeline
    in_units = 16
    in_channels = 8
    out_units = 8
    out_channels = 16        # out_units * out_channels = 128 -> lane-dense
    n_iterations = 3

    key = jax.random.PRNGKey(0)
    kx, kw = jax.random.split(key)
    x = jax.random.normal(kx, (batch, in_units, in_channels), jnp.float32)
    # nn.Parameter(torch.randn(in_units, in_channels, out_channels*out_units))
    W = jax.random.normal(
        kw, (in_units, in_channels, out_units * out_channels), jnp.float32)

    out = capsule_layer(x, W, out_units=out_units, out_channels=out_channels,
                        n_iterations=n_iterations)
    out = jax.block_until_ready(out)

    ref = capsule_layer_ref(x, W, out_units=out_units,
                            out_channels=out_channels,
                            n_iterations=n_iterations)
    assert out.shape == (batch, out_units, out_channels)
    # Tolerance allows for MXU pass-decomposition / summation-order
    # differences between the in-kernel matmuls and the XLA reference einsum.
    assert jnp.allclose(out, ref, atol=1e-2, rtol=1e-2), "mismatch vs reference"

    print("KERNEL_OK")
</pallas_src>

<mosaic_0001>
module attributes {stable_mosaic.version = 11 : i64} {
  func.func @_capsule_kernel(%arg0: i32, %arg1: memref<16x8x8xf32, #tpu.memory_space<vmem>>, %arg2: memref<16x8x128xf32, #tpu.memory_space<vmem>>, %arg3: memref<128x128xf32, #tpu.memory_space<vmem>>, %arg4: memref<8x128xf32, #tpu.memory_space<vmem>>) attributes {dimension_semantics = [#tpu.dimension_semantics<parallel>], iteration_bounds = array<i64: 2>, scalar_prefetch = 0 : i64, scratch_operands = 0 : i64, tpu.core_type = #tpu.core_type<tc>, window_params = [{transform_indices = @transform_0, window_bounds = array<i64: 16, 8, 8>}, {pipeline_mode = #tpu.pipeline_mode<synchronous>, transform_indices = @transform_1, window_bounds = array<i64: 16, 8, 128>}, {pipeline_mode = #tpu.pipeline_mode<synchronous>, transform_indices = @transform_2, window_bounds = array<i64: 128, 128>}, {transform_indices = @transform_3, window_bounds = array<i64: 8, 128>}]} {
    %c0 = arith.constant 0 : index
    %c0_0 = arith.constant 0 : index
    %c0_1 = arith.constant 0 : index
    %0 = vector.load %arg1[%c0, %c0_0, %c0_1] : memref<16x8x8xf32, #tpu.memory_space<vmem>>, vector<16x8x8xf32>
    %c0_2 = arith.constant 0 : index
    %c0_3 = arith.constant 0 : index
    %c0_4 = arith.constant 0 : index
    %1 = vector.load %arg2[%c0_2, %c0_3, %c0_4] : memref<16x8x128xf32, #tpu.memory_space<vmem>>, vector<16x8x128xf32>
    %c0_5 = arith.constant 0 : index
    %c0_6 = arith.constant 0 : index
    %2 = vector.load %arg3[%c0_5, %c0_6] : memref<128x128xf32, #tpu.memory_space<vmem>>, vector<128x128xf32>
    "tpu.trace_start"() <{level = 10 : i32, message = "ibc,icm->ibm"}> : () -> ()
    %cst = arith.constant dense<0.000000e+00> : vector<16x8x128xf32>
    %3 = tpu.matmul %0, %1, %cst {dimension_numbers = #tpu.dot_dimension_numbers<[2], [1], [1], [2], [0, 0, 0, 1, 1, 2], [0], [0]>} : vector<16x8x8xf32>, vector<16x8x128xf32>, vector<16x8x128xf32> -> vector<16x8x128xf32>
    %cst_7 = arith.constant 0.000000e+00 : f32
    "tpu.trace_stop"() : () -> ()
    %4 = vector.broadcast %cst_7 : f32 to vector<16x8x128xf32>
    %cst_8 = arith.constant dense<0xFF800000> : vector<8x128xf32>
    %5 = vector.multi_reduction <maximumf>, %4, %cst_8 [0] : vector<16x8x128xf32> to vector<8x128xf32>
    %6 = vector.shape_cast %5 : vector<8x128xf32> to vector<1x8x128xf32>
    %7 = vector.broadcast %6 : vector<1x8x128xf32> to vector<16x8x128xf32>
    %8 = arith.subf %4, %7 : vector<16x8x128xf32>
    %9 = math.exp %8 : vector<16x8x128xf32>
    %cst_9 = arith.constant dense<0.000000e+00> : vector<8x128xf32>
    %10 = vector.multi_reduction <add>, %9, %cst_9 [0] : vector<16x8x128xf32> to vector<8x128xf32>
    %11 = vector.shape_cast %10 : vector<8x128xf32> to vector<1x8x128xf32>
    %12 = vector.broadcast %11 : vector<1x8x128xf32> to vector<16x8x128xf32>
    %13 = arith.divf %9, %12 : vector<16x8x128xf32>
    %14 = arith.mulf %13, %3 : vector<16x8x128xf32>
    %cst_10 = arith.constant dense<0.000000e+00> : vector<8x128xf32>
    %15 = vector.multi_reduction <add>, %14, %cst_10 [0] : vector<16x8x128xf32> to vector<8x128xf32>
    %16 = arith.mulf %15, %15 : vector<8x128xf32>
    %cst_11 = arith.constant dense<0.000000e+00> : vector<8x128xf32>
    %17 = tpu.matmul %16, %2, %cst_11 {dimension_numbers = #tpu.dot_dimension_numbers<[1], [0], [0], [1], [0, 0, 1, 1], [], []>} : vector<8x128xf32>, vector<128x128xf32>, vector<8x128xf32> -> vector<8x128xf32>
    %18 = math.sqrt %17 : vector<8x128xf32>
    %19 = arith.mulf %15, %18 : vector<8x128xf32>
    %cst_12 = arith.constant 1.000000e+00 : f32
    %20 = vector.broadcast %cst_12 : f32 to vector<8x128xf32>
    %21 = arith.addf %20, %17 : vector<8x128xf32>
    %22 = arith.divf %19, %21 : vector<8x128xf32>
    %23 = vector.shape_cast %22 : vector<8x128xf32> to vector<1x8x128xf32>
    %24 = vector.broadcast %23 : vector<1x8x128xf32> to vector<16x8x128xf32>
    %25 = arith.mulf %3, %24 : vector<16x8x128xf32>
    %26 = vector.shape_cast %25 : vector<16x8x128xf32> to vector<128x128xf32>
    %cst_13 = arith.constant dense<0.000000e+00> : vector<128x128xf32>
    %27 = tpu.matmul %26, %2, %cst_13 {dimension_numbers = #tpu.dot_dimension_numbers<[1], [0], [0], [1], [0, 0, 1, 1], [], []>} : vector<128x128xf32>, vector<128x128xf32>, vector<128x128xf32> -> vector<128x128xf32>
    %28 = vector.shape_cast %27 : vector<128x128xf32> to vector<16x8x128xf32>
    %29 = arith.addf %4, %28 : vector<16x8x128xf32>
    %cst_14 = arith.constant dense<0xFF800000> : vector<8x128xf32>
    %30 = vector.multi_reduction <maximumf>, %29, %cst_14 [0] : vector<16x8x128xf32> to vector<8x128xf32>
    %31 = vector.shape_cast %30 : vector<8x128xf32> to vector<1x8x128xf32>
    %32 = vector.broadcast %31 : vector<1x8x128xf32> to vector<16x8x128xf32>
    %33 = arith.subf %29, %32 : vector<16x8x128xf32>
    %34 = math.exp %33 : vector<16x8x128xf32>
    %cst_15 = arith.constant dense<0.000000e+00> : vector<8x128xf32>
    %35 = vector.multi_reduction <add>, %34, %cst_15 [0] : vector<16x8x128xf32> to vector<8x128xf32>
    %36 = vector.shape_cast %35 : vector<8x128xf32> to vector<1x8x128xf32>
    %37 = vector.broadcast %36 : vector<1x8x128xf32> to vector<16x8x128xf32>
    %38 = arith.divf %34, %37 : vector<16x8x128xf32>
    %39 = arith.mulf %38, %3 : vector<16x8x128xf32>
    %cst_16 = arith.constant dense<0.000000e+00> : vector<8x128xf32>
    %40 = vector.multi_reduction <add>, %39, %cst_16 [0] : vector<16x8x128xf32> to vector<8x128xf32>
    %41 = arith.mulf %40, %40 : vector<8x128xf32>
    %cst_17 = arith.constant dense<0.000000e+00> : vector<8x128xf32>
    %42 = tpu.matmul %41, %2, %cst_17 {dimension_numbers = #tpu.dot_dimension_numbers<[1], [0], [0], [1], [0, 0, 1, 1], [], []>} : vector<8x128xf32>, vector<128x128xf32>, vector<8x128xf32> -> vector<8x128xf32>
    %43 = math.sqrt %42 : vector<8x128xf32>
    %44 = arith.mulf %40, %43 : vector<8x128xf32>
    %cst_18 = arith.constant 1.000000e+00 : f32
    %45 = vector.broadcast %cst_18 : f32 to vector<8x128xf32>
    %46 = arith.addf %45, %42 : vector<8x128xf32>
    %47 = arith.divf %44, %46 : vector<8x128xf32>
    %48 = vector.shape_cast %47 : vector<8x128xf32> to vector<1x8x128xf32>
    %49 = vector.broadcast %48 : vector<1x8x128xf32> to vector<16x8x128xf32>
    %50 = arith.mulf %3, %49 : vector<16x8x128xf32>
    %51 = vector.shape_cast %50 : vector<16x8x128xf32> to vector<128x128xf32>
    %cst_19 = arith.constant dense<0.000000e+00> : vector<128x128xf32>
    %52 = tpu.matmul %51, %2, %cst_19 {dimension_numbers = #tpu.dot_dimension_numbers<[1], [0], [0], [1], [0, 0, 1, 1], [], []>} : vector<128x128xf32>, vector<128x128xf32>, vector<128x128xf32> -> vector<128x128xf32>
    %53 = vector.shape_cast %52 : vector<128x128xf32> to vector<16x8x128xf32>
    %54 = arith.addf %29, %53 : vector<16x8x128xf32>
    %cst_20 = arith.constant dense<0xFF800000> : vector<8x128xf32>
    %55 = vector.multi_reduction <maximumf>, %54, %cst_20 [0] : vector<16x8x128xf32> to vector<8x128xf32>
    %56 = vector.shape_cast %55 : vector<8x128xf32> to vector<1x8x128xf32>
    %57 = vector.broadcast %56 : vector<1x8x128xf32> to vector<16x8x128xf32>
    %58 = arith.subf %54, %57 : vector<16x8x128xf32>
    %59 = math.exp %58 : vector<16x8x128xf32>
    %cst_21 = arith.constant dense<0.000000e+00> : vector<8x128xf32>
    %60 = vector.multi_reduction <add>, %59, %cst_21 [0] : vector<16x8x128xf32> to vector<8x128xf32>
    %61 = vector.shape_cast %60 : vector<8x128xf32> to vector<1x8x128xf32>
    %62 = vector.broadcast %61 : vector<1x8x128xf32> to vector<16x8x128xf32>
    %63 = arith.divf %59, %62 : vector<16x8x128xf32>
    %64 = arith.mulf %63, %3 : vector<16x8x128xf32>
    %cst_22 = arith.constant dense<0.000000e+00> : vector<8x128xf32>
    %65 = vector.multi_reduction <add>, %64, %cst_22 [0] : vector<16x8x128xf32> to vector<8x128xf32>
    %66 = arith.mulf %65, %65 : vector<8x128xf32>
    %cst_23 = arith.constant dense<0.000000e+00> : vector<8x128xf32>
    %67 = tpu.matmul %66, %2, %cst_23 {dimension_numbers = #tpu.dot_dimension_numbers<[1], [0], [0], [1], [0, 0, 1, 1], [], []>} : vector<8x128xf32>, vector<128x128xf32>, vector<8x128xf32> -> vector<8x128xf32>
    %68 = math.sqrt %67 : vector<8x128xf32>
    %69 = arith.mulf %65, %68 : vector<8x128xf32>
    %cst_24 = arith.constant 1.000000e+00 : f32
    %70 = vector.broadcast %cst_24 : f32 to vector<8x128xf32>
    %71 = arith.addf %70, %67 : vector<8x128xf32>
    %72 = arith.divf %69, %71 : vector<8x128xf32>
    %c0_25 = arith.constant 0 : index
    %c0_26 = arith.constant 0 : index
    %73 = vector.load %arg4[%c0_25, %c0_26] : memref<8x128xf32, #tpu.memory_space<vmem>>, vector<8x128xf32>
    tpu.vector_store %arg4[%c0_25, %c0_26], %72 {strides = array<i32>} : memref<8x128xf32, #tpu.memory_space<vmem>>, vector<8x128xf32>,
    return
  }
  func.func @transform_0(%arg0: i32) -> (i32, i32, i32) {
    %c0_i32 = arith.constant 0 : i32
    %c0_i32_0 = arith.constant 0 : i32
    %c0_i32_1 = arith.constant 0 : i32
    return %c0_i32, %arg0, %c0_i32_0 : i32, i32, i32
  }
  func.func @transform_1(%arg0: i32) -> (i32, i32, i32) {
    %c0_i32 = arith.constant 0 : i32
    %c0_i32_0 = arith.constant 0 : i32
    %c0_i32_1 = arith.constant 0 : i32
    %c0_i32_2 = arith.constant 0 : i32
    return %c0_i32, %c0_i32_0, %c0_i32_1 : i32, i32, i32
  }
  func.func @transform_2(%arg0: i32) -> (i32, i32) {
    %c0_i32 = arith.constant 0 : i32
    %c0_i32_0 = arith.constant 0 : i32
    %c0_i32_1 = arith.constant 0 : i32
    return %c0_i32, %c0_i32_0 : i32, i32
  }
  func.func @transform_3(%arg0: i32) -> (i32, i32) {
    %c0_i32 = arith.constant 0 : i32
    %c0_i32_0 = arith.constant 0 : i32
    return %arg0, %c0_i32 : i32, i32
  }
}

</mosaic_0001>

<llo_original>
// kernel: tpu_custom_call.1
$region0: #{tpu_custom_call.1}
  #allocation0 [shape = 'u32[]', space=smem, size = 0x4, offset = 0x4, fixed_abs, tag = 'smem constant byte address 0x4 - core index']
  #allocation1 [shape = 'u32[72,128]{1,0:T(1,128)}', space=vmem, size = 0x9000, scoped, tag = 'internal scratch']
  %s0 = inlined_call_operand.vmem [shape: f32[16,16,8], index: 0, kind: input, shape index: {}]
  %s1 = inlined_call_operand.vmem [shape: f32[16,8,128], index: 1, kind: input, shape index: {}]
  %s2 = inlined_call_operand.vmem [shape: f32[128,128], index: 2, kind: input, shape index: {}]
  %s3 = inlined_call_operand.hbm [shape: f32[16,128], index: 3, kind: output, shape index: {}]
  %s4 = sld [smem:[#allocation0]]
  $region83: #{tpu_custom_call.1} parent=0
    _
  %s6 = ssub.s32 1, %s4
  %s7 = scalar_select 0, %s6, %s4
  $region1: #{tpu_custom_call.1} parent=0
    #allocation2 [shape = 'u8[131072]{0}', space=vmem, size = 0x20000, scoped, tag = 'input window, operand 0']
    #allocation3 [shape = 'u8[8192]{0}', space=vmem, size = 0x2000, scoped, tag = 'output window, operand 0']
    #allocation4 [shape = 's32[2]{0}', space=sflag, size = 0x8, scoped, tag = 'scoped memory for tpu_custom_call.1']
    %8 = vsyncpa [#allocation4], 0
    %s9 = scalar_lea.sflag [#allocation4], 1
    %10 = vsyncpa %s9, 0
    loop: start=0, step=1, limit=4
    $region2: #{tpu_custom_call.1} parent=1 // loop_pre_header
      _
    $region3: #{tpu_custom_call.1} parent=1 // loop_header
      %s12 = sphi 0, %s16
      %p13 = scmp.ge.s32.totalorder %s12, 4
      %s22 = sphi 0, %s24
      %s25 = sphi 0, %s22
      %s26 = sphi 0, %s25
      %s42 = sphi 0, %s26
      %s46 = sphi 0, %s46
      %s48 = sphi 0, %s46
      %s49 = sphi 0, %s48
      %s63 = sphi 0, %s49
      %s67 = sphi 0, %s67
      %s69 = sphi 0, %s67
      %s70 = sphi 0, %s69
      %s84 = sphi 0, %s70
      %s90 = sphi 0, %s92
      %s93 = sphi 0, %s90
      %s94 = sphi 0, %s93
      %s110 = sphi 0, %s94
    $region4: #{tpu_custom_call.1} parent=1 // loop_header_branch
      %15 = sbr.rel (%p13) target = $region8
    $region5: #{tpu_custom_call.1} parent=1 // loop_body
      %s17 = ssub.s32 %s12, 1
      %s18 = ssub.s32 %s12, 2
      %s19 = sadd.s32 %s12, 1
      %s20 = ssub.s32 %s12, %s19
      %p21 = scmp.eq.s32.totalorder %s20, 0
      %s23 = sadd.s32 %s22, 1
      %s24 = scalar_select %p21, %s22, %s23
      %p27 = pneg %p21
      %p28 = scmp.eq.s32.totalorder %s12, 1
      %p29 = por %p27, %p28
      %p30 = scmp.ne.s32.totalorder %s22, %s25
      %p31 = scmp.eq.s32.totalorder %s12, 0
      %p32 = por %p30, %p31
      %p33 = scmp.ne.s32.totalorder %s22, %s25
      %p34 = scmp.eq.s32.totalorder %s17, 1
      %p35 = por %p33, %p34
      %p36 = scmp.ne.s32.totalorder %s25, %s26
      %p37 = scmp.eq.s32.totalorder %s17, 0
      %p38 = por %p36, %p37
      %p39 = scmp.ne.s32.totalorder %s25, %s26
      %p40 = scmp.eq.s32.totalorder %s18, 1
      %p41 = por %p39, %p40
      %p43 = scmp.ne.s32.totalorder %s26, %s42
      %p44 = scmp.eq.s32.totalorder %s18, 0
      %p45 = por %p43, %p44
      %s47 = sadd.s32 %s46, 1
      %p50 = scmp.eq.s32.totalorder %s12, 1
      %p51 = scmp.ne.s32.totalorder %s46, %s48
      %p52 = scmp.eq.s32.totalorder %s12, 0
      %p53 = por %p51, %p52
      %p54 = scmp.ne.s32.totalorder %s46, %s48
      %p55 = scmp.eq.s32.totalorder %s17, 1
      %p56 = por %p54, %p55
      %p57 = scmp.ne.s32.totalorder %s48, %s49
      %p58 = scmp.eq.s32.totalorder %s17, 0
      %p59 = por %p57, %p58
      %p60 = scmp.ne.s32.totalorder %s48, %s49
      %p61 = scmp.eq.s32.totalorder %s18, 1
      %p62 = por %p60, %p61
      %p64 = scmp.ne.s32.totalorder %s49, %s63
      %p65 = scmp.eq.s32.totalorder %s18, 0
      %p66 = por %p64, %p65
      %s68 = sadd.s32 %s67, 1
      %p71 = scmp.eq.s32.totalorder %s12, 1
      %p72 = scmp.ne.s32.totalorder %s67, %s69
      %p73 = scmp.eq.s32.totalorder %s12, 0
      %p74 = por %p72, %p73
      %p75 = scmp.ne.s32.totalorder %s67, %s69
      %p76 = scmp.eq.s32.totalorder %s17, 1
      %p77 = por %p75, %p76
      %p78 = scmp.ne.s32.totalorder %s69, %s70
      %p79 = scmp.eq.s32.totalorder %s17, 0
      %p80 = por %p78, %p79
      %p81 = scmp.ne.s32.totalorder %s69, %s70
      %p82 = scmp.eq.s32.totalorder %s18, 1
      %p83 = por %p81, %p82
      %p85 = scmp.ne.s32.totalorder %s70, %s84
      %p86 = scmp.eq.s32.totalorder %s18, 0
      %p87 = por %p85, %p86
      %s88 = ssub.s32 %s12, %s19
      %p89 = scmp.eq.s32.totalorder %s88, 0
      %s91 = sadd.s32 %s90, 1
      %s92 = scalar_select %p89, %s90, %s91
      %p95 = pneg %p89
      %p96 = scmp.eq.s32.totalorder %s12, 1
      %p97 = por %p95, %p96
      %p98 = scmp.ne.s32.totalorder %s90, %s93
      %p99 = scmp.eq.s32.totalorder %s12, 0
      %p100 = por %p98, %p99
      %p101 = scmp.ne.s32.totalorder %s90, %s93
      %p102 = scmp.eq.s32.totalorder %s17, 1
      %p103 = por %p101, %p102
      %p104 = scmp.ne.s32.totalorder %s93, %s94
      %p105 = scmp.eq.s32.totalorder %s17, 0
      %p106 = por %p104, %p105
      %p107 = scmp.ne.s32.totalorder %s93, %s94
      %p108 = scmp.eq.s32.totalorder %s18, 1
      %p109 = por %p107, %p108
      %p111 = scmp.ne.s32.totalorder %s94, %s110
      %p112 = scmp.eq.s32.totalorder %s18, 0
      %p113 = por %p111, %p112
      %p114 = scmp.le.s32.totalorder 1, %s12
      %p115 = scmp.lt.s32.totalorder %s12, 3
      %p116 = pnand %p114, %p115
      %p117 = pneg %p116
      // Predicated region
      $region9: #{tpu_custom_call.1} parent=5 // pred_check
        _
      $region10: #{tpu_custom_call.1} parent=5 // pred_check_branch
        %119 = sbr.rel (%p116) target = $region12
      $region11: #{tpu_custom_call.1} parent=5 // pred_region
        %s120 = ssub.s32 %s12, 1
        // Predicated region
        $region13: #{tpu_custom_call.1} parent=11 // pred_check
          %p121 = pneg %p59
        $region14: #{tpu_custom_call.1} parent=11 // pred_check_branch
          %123 = sbr.rel (%p121) target = $region16
        $region15: #{tpu_custom_call.1} parent=11 // pred_region
          _
        $region16: #{tpu_custom_call.1} parent=11 // pred_fallthru
          _
        // Predicated region
        $region17: #{tpu_custom_call.1} parent=11 // pred_check
          %p124 = pneg %p80
        $region18: #{tpu_custom_call.1} parent=11 // pred_check_branch
          %126 = sbr.rel (%p124) target = $region20
        $region19: #{tpu_custom_call.1} parent=11 // pred_region
          _
        $region20: #{tpu_custom_call.1} parent=11 // pred_fallthru
          _
      $region12: #{tpu_custom_call.1} parent=5 // pred_fallthru
        _
      %p127 = scmp.lt.s32.totalorder %s12, 2
      // Predicated region
      $region21: #{tpu_custom_call.1} parent=5 // pred_check
        %p128 = pneg %p127
      $region22: #{tpu_custom_call.1} parent=5 // pred_check_branch
        %130 = sbr.rel (%p128) target = $region24
      $region23: #{tpu_custom_call.1} parent=5 // pred_region
        // Predicated region
        $region25: #{tpu_custom_call.1} parent=23 // pred_check
          %p131 = pneg %p32
        $region26: #{tpu_custom_call.1} parent=23 // pred_check_branch
          %133 = sbr.rel (%p131) target = $region28
        $region27: #{tpu_custom_call.1} parent=23 // pred_region
          %s134 = sand.u32 %s22, 1
          %s135 = sand.u32 %s22, 1
          %s136 = smul.addr %s135, 128
          %s137 = scalar_lea.vmem [#allocation2], %s136
          %s138 = smul.addr %s12, 8
          %s139 = scalar_lea.vmem %s0, %s138
          // Predicated region
          $region29: #{tpu_custom_call.1} parent=27 // pred_check
            _
          $region30: #{tpu_custom_call.1} parent=27 // pred_check_branch
            %141 = sbr.rel (0) target = $region32
          $region31: #{tpu_custom_call.1} parent=27 // pred_region
            // Predicated region
            $region33: #{tpu_custom_call.1} parent=31 // pred_check
              _
            $region34: #{tpu_custom_call.1} parent=31 // pred_check_branch
              %143 = sbr.rel (0) target = $region36
            $region35: #{tpu_custom_call.1} parent=31 // pred_region
              // Predicated region
              $region48: #{tpu_custom_call.1} parent=35 // pred_check
                _
              $region49: #{tpu_custom_call.1} parent=35 // pred_check_branch
                %189 = sbr.rel (0) target = $region51
              $region50: #{tpu_custom_call.1} parent=35 // pred_region
                loop: start=0, step=1, limit=1
                $region52: #{tpu_custom_call.1} parent=50 // loop_pre_header
                  _
                $region53: #{tpu_custom_call.1} parent=50 // loop_header
                  %s191 = sphi 0, %s195
                  %p192 = scmp.ge.s32.totalorder %s191, 1
                  %s196 = sphi %s139, %s139
                  %s197 = sphi %s137, %s137
                $region54: #{tpu_custom_call.1} parent=50 // loop_header_branch
                  %194 = sbr.rel (%p192) target = $region58
                $region55: #{tpu_custom_call.1} parent=50 // loop_body
                  %v198 = vld [vmem:[%s196] sm:$0xff]
                  %199 = vst [vmem:[%s197] sm:$0xff] %v198
                  %v200 = vld [vmem:[%s196 + $0x10] sm:$0xff]
                  %201 = vst [vmem:[%s197 + $0x8] sm:$0xff] %v200
                  %v202 = vld [vmem:[%s196 + $0x20] sm:$0xff]
                  %203 = vst [vmem:[%s197 + $0x10] sm:$0xff] %v202
                  %v204 = vld [vmem:[%s196 + $0x30] sm:$0xff]
                  %205 = vst [vmem:[%s197 + $0x18] sm:$0xff] %v204
                  %v206 = vld [vmem:[%s196 + $0x40] sm:$0xff]
                  %207 = vst [vmem:[%s197 + $0x20] sm:$0xff] %v206
                  %v208 = vld [vmem:[%s196 + $0x50] sm:$0xff]
                  %209 = vst [vmem:[%s197 + $0x28] sm:$0xff] %v208
                  %v210 = vld [vmem:[%s196 + $0x60] sm:$0xff]
                  %211 = vst [vmem:[%s197 + $0x30] sm:$0xff] %v210
                  %v212 = vld [vmem:[%s196 + $0x70] sm:$0xff]
                  %213 = vst [vmem:[%s197 + $0x38] sm:$0xff] %v212
                  %v214 = vld [vmem:[%s196 + $0x80] sm:$0xff]
                  %215 = vst [vmem:[%s197 + $0x40] sm:$0xff] %v214
                  %v216 = vld [vmem:[%s196 + $0x90] sm:$0xff]
                  %217 = vst [vmem:[%s197 + $0x48] sm:$0xff] %v216
                  %v218 = vld [vmem:[%s196 + $0xa0] sm:$0xff]
                  %219 = vst [vmem:[%s197 + $0x50] sm:$0xff] %v218
                  %v220 = vld [vmem:[%s196 + $0xb0] sm:$0xff]
                  %221 = vst [vmem:[%s197 + $0x58] sm:$0xff] %v220
                  %v222 = vld [vmem:[%s196 + $0xc0] sm:$0xff]
                  %223 = vst [vmem:[%s197 + $0x60] sm:$0xff] %v222
                  %v224 = vld [vmem:[%s196 + $0xd0] sm:$0xff]
                  %225 = vst [vmem:[%s197 + $0x68] sm:$0xff] %v224
                  %v226 = vld [vmem:[%s196 + $0xe0] sm:$0xff]
                  %227 = vst [vmem:[%s197 + $0x70] sm:$0xff] %v226
                  %v228 = vld [vmem:[%s196 + $0xf0] sm:$0xff]
                  %229 = vst [vmem:[%s197 + $0x78] sm:$0xff] %v228
                $region56: #{tpu_custom_call.1} parent=50 // loop_footer
                  %s195 = sadd.s32 1, %s191
                $region57: #{tpu_custom_call.1} parent=50 // loop_footer_branch
                  %190 = sbr.rel target = $region53
                $region58: #{tpu_custom_call.1} parent=50 // loop_exit
                  _
              $region51: #{tpu_custom_call.1} parent=35 // pred_fallthru
                _
              // Predicated region
              $region59: #{tpu_custom_call.1} parent=35 // pred_check
                _
              $region60: #{tpu_custom_call.1} parent=35 // pred_check_branch
                %231 = sbr.rel target = $region62
              $region61: #{tpu_custom_call.1} parent=35 // pred_region
                _
              $region62: #{tpu_custom_call.1} parent=35 // pred_fallthru
                _
            $region36: #{tpu_custom_call.1} parent=31 // pred_fallthru
              _
            // Predicated region
            $region37: #{tpu_custom_call.1} parent=31 // pred_check
              _
            $region38: #{tpu_custom_call.1} parent=31 // pred_check_branch
              %145 = sbr.rel target = $region40
            $region39: #{tpu_custom_call.1} parent=31 // pred_region
              %s147 = ssub.s32 256, 1
              loop: start=0, step=1, limit=1
              $region41: #{tpu_custom_call.1} parent=39 // loop_pre_header
                _
              $region42: #{tpu_custom_call.1} parent=39 // loop_header
                %s149 = sphi 0, %s153
                %p150 = scmp.ge.s32.totalorder %s149, 1
                %s154 = sphi %s139, %s139
                %s155 = sphi %s137, %s137
              $region43: #{tpu_custom_call.1} parent=39 // loop_header_branch
                %152 = sbr.rel (%p150) target = $region47
              $region44: #{tpu_custom_call.1} parent=39 // loop_body
                %v156 = vld [vmem:[%s154] sm:%s147]
                %157 = vst [vmem:[%s155] sm:%s147] %v156
                %v158 = vld [vmem:[%s154 + $0x10] sm:%s147]
                %159 = vst [vmem:[%s155 + $0x8] sm:%s147] %v158
                %v160 = vld [vmem:[%s154 + $0x20] sm:%s147]
                %161 = vst [vmem:[%s155 + $0x10] sm:%s147] %v160
                %v162 = vld [vmem:[%s154 + $0x30] sm:%s147]
                %163 = vst [vmem:[%s155 + $0x18] sm:%s147] %v162
                %v164 = vld [vmem:[%s154 + $0x40] sm:%s147]
                %165 = vst [vmem:[%s155 + $0x20] sm:%s147] %v164
                %v166 = vld [vmem:[%s154 + $0x50] sm:%s147]
                %167 = vst [vmem:[%s155 + $0x28] sm:%s147] %v166
                %v168 = vld [vmem:[%s154 + $0x60] sm:%s147]
                %169 = vst [vmem:[%s155 + $0x30] sm:%s147] %v168
                %v170 = vld [vmem:[%s154 + $0x70] sm:%s147]
                %171 = vst [vmem:[%s155 + $0x38] sm:%s147] %v170
                %v172 = vld [vmem:[%s154 + $0x80] sm:%s147]
                %173 = vst [vmem:[%s155 + $0x40] sm:%s147] %v172
                %v174 = vld [vmem:[%s154 + $0x90] sm:%s147]
                %175 = vst [vmem:[%s155 + $0x48] sm:%s147] %v174
                %v176 = vld [vmem:[%s154 + $0xa0] sm:%s147]
                %177 = vst [vmem:[%s155 + $0x50] sm:%s147] %v176
                %v178 = vld [vmem:[%s154 + $0xb0] sm:%s147]
                %179 = vst [vmem:[%s155 + $0x58] sm:%s147] %v178
                %v180 = vld [vmem:[%s154 + $0xc0] sm:%s147]
                %181 = vst [vmem:[%s155 + $0x60] sm:%s147] %v180
                %v182 = vld [vmem:[%s154 + $0xd0] sm:%s147]
                %183 = vst [vmem:[%s155 + $0x68] sm:%s147] %v182
                %v184 = vld [vmem:[%s154 + $0xe0] sm:%s147]
                %185 = vst [vmem:[%s155 + $0x70] sm:%s147] %v184
                %v186 = vld [vmem:[%s154 + $0xf0] sm:%s147]
                %187 = vst [vmem:[%s155 + $0x78] sm:%s147] %v186
              $region45: #{tpu_custom_call.1} parent=39 // loop_footer
                %s153 = sadd.s32 1, %s149
              $region46: #{tpu_custom_call.1} parent=39 // loop_footer_branch
                %148 = sbr.rel target = $region42
              $region47: #{tpu_custom_call.1} parent=39 // loop_exit
                _
            $region40: #{tpu_custom_call.1} parent=31 // pred_fallthru
              _
          $region32: #{tpu_custom_call.1} parent=27 // pred_fallthru
            _
          %232 = vnop
        $region28: #{tpu_custom_call.1} parent=23 // pred_fallthru
          _
      $region24: #{tpu_custom_call.1} parent=5 // pred_fallthru
        _
      %p233 = scmp.le.s32.totalorder 1, %s12
      %p234 = scmp.lt.s32.totalorder %s12, 3
      %p235 = pnand %p233, %p234
      %p236 = pneg %p235
      // Predicated region
      $region63: #{tpu_custom_call.1} parent=5 // pred_check
        _
      $region64: #{tpu_custom_call.1} parent=5 // pred_check_branch
        %238 = sbr.rel (%p235) target = $region66
      $region65: #{tpu_custom_call.1} parent=5 // pred_region
        %s239 = ssub.s32 %s12, 1
        %s240 = sand.u32 %s25, 1
        %s241 = sand.u32 %s25, 1
        %s242 = smul.addr %s241, 128
        %s243 = scalar_lea.vmem [#allocation2], %s242
        // Predicated region
        $region67: #{tpu_custom_call.1} parent=65 // pred_check
          %p244 = pneg %p38
        $region68: #{tpu_custom_call.1} parent=65 // pred_check_branch
          %246 = sbr.rel (%p244) target = $region70
        $region69: #{tpu_custom_call.1} parent=65 // pred_region
          _
        $region70: #{tpu_custom_call.1} parent=65 // pred_fallthru
          _
        %s247 = sand.u32 %s25, 1
        %s248 = sand.u32 %s25, 1
        %s249 = smul.addr %s248, 128
        %s250 = scalar_lea.vmem [#allocation2], %s249
        %p251 = pneg %p38
        %p252 = pneg %p35
        %p253 = pneg %p59
        %p254 = pneg %p56
        %p255 = pneg %p80
        %p256 = pneg %p77
        %p257 = pneg %p106
        %p258 = pneg %p103
        %s259 = sand.u32 %s93, 1
        %s260 = scalar_lea.sflag [#allocation4], %s259
        %s261 = sand.u32 %s93, 1
        %s262 = smul.addr %s261, 8
        %s263 = scalar_lea.vmem [#allocation3], %s262
        %v264 = vld [vmem:[%s243] sm:$0xff]
        %v265 = vld [vmem:[%s243 + $0x8] sm:$0xff]
        %v266 = vld [vmem:[%s243 + $0x10] sm:$0xff]
        %v267 = vld [vmem:[%s243 + $0x18] sm:$0xff]
        %v268 = vld [vmem:[%s243 + $0x20] sm:$0xff]
        %v269 = vld [vmem:[%s243 + $0x28] sm:$0xff]
        %v270 = vld [vmem:[%s243 + $0x30] sm:$0xff]
        %v271 = vld [vmem:[%s243 + $0x38] sm:$0xff]
        %v272 = vld [vmem:[%s243 + $0x40] sm:$0xff]
        %v273 = vld [vmem:[%s243 + $0x48] sm:$0xff]
        %v274 = vld [vmem:[%s243 + $0x50] sm:$0xff]
        %v275 = vld [vmem:[%s243 + $0x58] sm:$0xff]
        %v276 = vld [vmem:[%s243 + $0x60] sm:$0xff]
        %v277 = vld [vmem:[%s243 + $0x68] sm:$0xff]
        %v278 = vld [vmem:[%s243 + $0x70] sm:$0xff]
        %v279 = vld [vmem:[%s243 + $0x78] sm:$0xff]
        %v280 = vld [vmem:[%s1] sm:$0xff]
        %v281 = vld [vmem:[%s1 + $0x8] sm:$0xff]
        %v282 = vld [vmem:[%s1 + $0x10] sm:$0xff]
        %v283 = vld [vmem:[%s1 + $0x18] sm:$0xff]
        %v284 = vld [vmem:[%s1 + $0x20] sm:$0xff]
        %v285 = vld [vmem:[%s1 + $0x28] sm:$0xff]
        %v286 = vld [vmem:[%s1 + $0x30] sm:$0xff]
        %v287 = vld [vmem:[%s1 + $0x38] sm:$0xff]
        %v288 = vld [vmem:[%s1 + $0x40] sm:$0xff]
        %v289 = vld [vmem:[%s1 + $0x48] sm:$0xff]
        %v290 = vld [vmem:[%s1 + $0x50] sm:$0xff]
        %v291 = vld [vmem:[%s1 + $0x58] sm:$0xff]
        %v292 = vld [vmem:[%s1 + $0x60] sm:$0xff]
        %v293 = vld [vmem:[%s1 + $0x68] sm:$0xff]
        %v294 = vld [vmem:[%s1 + $0x70] sm:$0xff]
        %v295 = vld [vmem:[%s1 + $0x78] sm:$0xff]
        %v296 = vld [vmem:[%s2] sm:$0xff]
        %v297 = vld [vmem:[%s2 + $0x8] sm:$0xff]
        %v298 = vld [vmem:[%s2 + $0x10] sm:$0xff]
        %v299 = vld [vmem:[%s2 + $0x18] sm:$0xff]
        %v300 = vld [vmem:[%s2 + $0x20] sm:$0xff]
        %v301 = vld [vmem:[%s2 + $0x28] sm:$0xff]
        %v302 = vld [vmem:[%s2 + $0x30] sm:$0xff]
        %v303 = vld [vmem:[%s2 + $0x38] sm:$0xff]
        %v304 = vld [vmem:[%s2 + $0x40] sm:$0xff]
        %v305 = vld [vmem:[%s2 + $0x48] sm:$0xff]
        %v306 = vld [vmem:[%s2 + $0x50] sm:$0xff]
        %v307 = vld [vmem:[%s2 + $0x58] sm:$0xff]
        %v308 = vld [vmem:[%s2 + $0x60] sm:$0xff]
        %v309 = vld [vmem:[%s2 + $0x68] sm:$0xff]
        %v310 = vld [vmem:[%s2 + $0x70] sm:$0xff]
        %v311 = vld [vmem:[%s2 + $0x78] sm:$0xff]
        %vm312 = vcmask 64512
        %v314 = vsel %vm312, %v264, 0
        %316 = vmatpush.msra.mxu0 0.0
        %317 = vmatpush.msra.mxu0 0.0
        %318 = vmatpush.msra.mxu0 0.0
        %319 = vmatpush.msra.mxu0 0.0
        %320 = vmatpush.msra.mxu0 0.0
        %321 = vmatpush.msra.mxu0 0.0
        %322 = vmatpush.msra.mxu0 0.0
        %323 = vmatpush.msra.mxu0 0.0
        %324 = vmatpush.msra.mxu0 0.0
        %325 = vmatpush.msra.mxu0 0.0
        %326 = vmatpush.msra.mxu0 0.0
        %327 = vmatpush.msra.mxu0 0.0
        %328 = vmatpush.msra.mxu0 0.0
        %329 = vmatpush.msra.mxu0 0.0
        %330 = vmatpush.msra.mxu0 0.0
        %331 = vmatpush.msra.mxu0 %v280
        %332 = vmatmul.f32.gmra.mxu0 %v314
        %v333 = vpop.f32.mrf.mxu0
        %v334 = vadd.f32 0.0, %v333
        %335 = vdwg.mxu0
        %v337 = vsel %vm312, %v265, 0
        %339 = vmatpush.msra.mxu0 0.0
        %340 = vmatpush.msra.mxu0 0.0
        %341 = vmatpush.msra.mxu0 0.0
        %342 = vmatpush.msra.mxu0 0.0
        %343 = vmatpush.msra.mxu0 0.0
        %344 = vmatpush.msra.mxu0 0.0
        %345 = vmatpush.msra.mxu0 0.0
        %346 = vmatpush.msra.mxu0 0.0
        %347 = vmatpush.msra.mxu0 0.0
        %348 = vmatpush.msra.mxu0 0.0
        %349 = vmatpush.msra.mxu0 0.0
        %350 = vmatpush.msra.mxu0 0.0
        %351 = vmatpush.msra.mxu0 0.0
        %352 = vmatpush.msra.mxu0 0.0
        %353 = vmatpush.msra.mxu0 0.0
        %354 = vmatpush.msra.mxu0 %v281
        %355 = vmatmul.f32.gmra.mxu0 %v337
        %v356 = vpop.f32.mrf.mxu0
        %v357 = vadd.f32 0.0, %v356
        %358 = vdwg.mxu0
        %v360 = vsel %vm312, %v266, 0
        %362 = vmatpush.msra.mxu0 0.0
        %363 = vmatpush.msra.mxu0 0.0
        %364 = vmatpush.msra.mxu0 0.0
        %365 = vmatpush.msra.mxu0 0.0
        %366 = vmatpush.msra.mxu0 0.0
        %367 = vmatpush.msra.mxu0 0.0
        %368 = vmatpush.msra.mxu0 0.0
        %369 = vmatpush.msra.mxu0 0.0
        %370 = vmatpush.msra.mxu0 0.0
        %371 = vmatpush.msra.mxu0 0.0
        %372 = vmatpush.msra.mxu0 0.0
        %373 = vmatpush.msra.mxu0 0.0
        %374 = vmatpush.msra.mxu0 0.0
        %375 = vmatpush.msra.mxu0 0.0
        %376 = vmatpush.msra.mxu0 0.0
        %377 = vmatpush.msra.mxu0 %v282
        %378 = vmatmul.f32.gmra.mxu0 %v360
        %v379 = vpop.f32.mrf.mxu0
        %v380 = vadd.f32 0.0, %v379
        %381 = vdwg.mxu0
        %v383 = vsel %vm312, %v267, 0
        %385 = vmatpush.msra.mxu0 0.0
        %386 = vmatpush.msra.mxu0 0.0
        %387 = vmatpush.msra.mxu0 0.0
        %388 = vmatpush.msra.mxu0 0.0
        %389 = vmatpush.msra.mxu0 0.0
        %390 = vmatpush.msra.mxu0 0.0
        %391 = vmatpush.msra.mxu0 0.0
        %392 = vmatpush.msra.mxu0 0.0
        %393 = vmatpush.msra.mxu0 0.0
        %394 = vmatpush.msra.mxu0 0.0
        %395 = vmatpush.msra.mxu0 0.0
        %396 = vmatpush.msra.mxu0 0.0
        %397 = vmatpush.msra.mxu0 0.0
        %398 = vmatpush.msra.mxu0 0.0
        %399 = vmatpush.msra.mxu0 0.0
        %400 = vmatpush.msra.mxu0 %v283
        %401 = vmatmul.f32.gmra.mxu0 %v383
        %v402 = vpop.f32.mrf.mxu0
        %v403 = vadd.f32 0.0, %v402
        %404 = vdwg.mxu0
        %v406 = vsel %vm312, %v268, 0
        %408 = vmatpush.msra.mxu0 0.0
        %409 = vmatpush.msra.mxu0 0.0
        %410 = vmatpush.msra.mxu0 0.0
        %411 = vmatpush.msra.mxu0 0.0
        %412 = vmatpush.msra.mxu0 0.0
        %413 = vmatpush.msra.mxu0 0.0
        %414 = vmatpush.msra.mxu0 0.0
        %415 = vmatpush.msra.mxu0 0.0
        %416 = vmatpush.msra.mxu0 0.0
        %417 = vmatpush.msra.mxu0 0.0
        %418 = vmatpush.msra.mxu0 0.0
        %419 = vmatpush.msra.mxu0 0.0
        %420 = vmatpush.msra.mxu0 0.0
        %421 = vmatpush.msra.mxu0 0.0
        %422 = vmatpush.msra.mxu0 0.0
        %423 = vmatpush.msra.mxu0 %v284
        %424 = vmatmul.f32.gmra.mxu0 %v406
        %v425 = vpop.f32.mrf.mxu0
        %v426 = vadd.f32 0.0, %v425
        %427 = vdwg.mxu0
        %v429 = vsel %vm312, %v269, 0
        %431 = vmatpush.msra.mxu0 0.0
        %432 = vmatpush.msra.mxu0 0.0
        %433 = vmatpush.msra.mxu0 0.0
        %434 = vmatpush.msra.mxu0 0.0
        %435 = vmatpush.msra.mxu0 0.0
        %436 = vmatpush.msra.mxu0 0.0
        %437 = vmatpush.msra.mxu0 0.0
        %438 = vmatpush.msra.mxu0 0.0
        %439 = vmatpush.msra.mxu0 0.0
        %440 = vmatpush.msra.mxu0 0.0
        %441 = vmatpush.msra.mxu0 0.0
        %442 = vmatpush.msra.mxu0 0.0
        %443 = vmatpush.msra.mxu0 0.0
        %444 = vmatpush.msra.mxu0 0.0
        %445 = vmatpush.msra.mxu0 0.0
        %446 = vmatpush.msra.mxu0 %v285
        %447 = vmatmul.f32.gmra.mxu0 %v429
        %v448 = vpop.f32.mrf.mxu0
        %v449 = vadd.f32 0.0, %v448
        %450 = vdwg.mxu0
        %v452 = vsel %vm312, %v270, 0
        %454 = vmatpush.msra.mxu0 0.0
        %455 = vmatpush.msra.mxu0 0.0
        %456 = vmatpush.msra.mxu0 0.0
        %457 = vmatpush.msra.mxu0 0.0
        %458 = vmatpush.msra.mxu0 0.0
        %459 = vmatpush.msra.mxu0 0.0
        %460 = vmatpush.msra.mxu0 0.0
        %461 = vmatpush.msra.mxu0 0.0
        %462 = vmatpush.msra.mxu0 0.0
        %463 = vmatpush.msra.mxu0 0.0
        %464 = vmatpush.msra.mxu0 0.0
        %465 = vmatpush.msra.mxu0 0.0
        %466 = vmatpush.msra.mxu0 0.0
        %467 = vmatpush.msra.mxu0 0.0
        %468 = vmatpush.msra.mxu0 0.0
        %469 = vmatpush.msra.mxu0 %v286
        %470 = vmatmul.f32.gmra.mxu0 %v452
        %v471 = vpop.f32.mrf.mxu0
        %v472 = vadd.f32 0.0, %v471
        %473 = vdwg.mxu0
        %v475 = vsel %vm312, %v271, 0
        %477 = vmatpush.msra.mxu0 0.0
        %478 = vmatpush.msra.mxu0 0.0
        %479 = vmatpush.msra.mxu0 0.0
        %480 = vmatpush.msra.mxu0 0.0
        %481 = vmatpush.msra.mxu0 0.0
        %482 = vmatpush.msra.mxu0 0.0
        %483 = vmatpush.msra.mxu0 0.0
        %484 = vmatpush.msra.mxu0 0.0
        %485 = vmatpush.msra.mxu0 0.0
        %486 = vmatpush.msra.mxu0 0.0
        %487 = vmatpush.msra.mxu0 0.0
        %488 = vmatpush.msra.mxu0 0.0
        %489 = vmatpush.msra.mxu0 0.0
        %490 = vmatpush.msra.mxu0 0.0
        %491 = vmatpush.msra.mxu0 0.0
        %492 = vmatpush.msra.mxu0 %v287
        %493 = vmatmul.f32.gmra.mxu0 %v475
        %v494 = vpop.f32.mrf.mxu0
        %v495 = vadd.f32 0.0, %v494
        %496 = vdwg.mxu0
        %v498 = vsel %vm312, %v272, 0
        %500 = vmatpush.msra.mxu0 0.0
        %501 = vmatpush.msra.mxu0 0.0
        %502 = vmatpush.msra.mxu0 0.0
        %503 = vmatpush.msra.mxu0 0.0
        %504 = vmatpush.msra.mxu0 0.0
        %505 = vmatpush.msra.mxu0 0.0
        %506 = vmatpush.msra.mxu0 0.0
        %507 = vmatpush.msra.mxu0 0.0
        %508 = vmatpush.msra.mxu0 0.0
        %509 = vmatpush.msra.mxu0 0.0
        %510 = vmatpush.msra.mxu0 0.0
        %511 = vmatpush.msra.mxu0 0.0
        %512 = vmatpush.msra.mxu0 0.0
        %513 = vmatpush.msra.mxu0 0.0
        %514 = vmatpush.msra.mxu0 0.0
        %515 = vmatpush.msra.mxu0 %v288
        %516 = vmatmul.f32.gmra.mxu0 %v498
        %v517 = vpop.f32.mrf.mxu0
        %v518 = vadd.f32 0.0, %v517
        %519 = vdwg.mxu0
        %v521 = vsel %vm312, %v273, 0
        %523 = vmatpush.msra.mxu0 0.0
        %524 = vmatpush.msra.mxu0 0.0
        %525 = vmatpush.msra.mxu0 0.0
        %526 = vmatpush.msra.mxu0 0.0
        %527 = vmatpush.msra.mxu0 0.0
        %528 = vmatpush.msra.mxu0 0.0
        %529 = vmatpush.msra.mxu0 0.0
        %530 = vmatpush.msra.mxu0 0.0
        %531 = vmatpush.msra.mxu0 0.0
        %532 = vmatpush.msra.mxu0 0.0
        %533 = vmatpush.msra.mxu0 0.0
        %534 = vmatpush.msra.mxu0 0.0
        %535 = vmatpush.msra.mxu0 0.0
        %536 = vmatpush.msra.mxu0 0.0
        %537 = vmatpush.msra.mxu0 0.0
        %538 = vmatpush.msra.mxu0 %v289
        %539 = vmatmul.f32.gmra.mxu0 %v521
        %v540 = vpop.f32.mrf.mxu0
        %v541 = vadd.f32 0.0, %v540
        %542 = vdwg.mxu0
        %v544 = vsel %vm312, %v274, 0
        %546 = vmatpush.msra.mxu0 0.0
        %547 = vmatpush.msra.mxu0 0.0
        %548 = vmatpush.msra.mxu0 0.0
        %549 = vmatpush.msra.mxu0 0.0
        %550 = vmatpush.msra.mxu0 0.0
        %551 = vmatpush.msra.mxu0 0.0
        %552 = vmatpush.msra.mxu0 0.0
        %553 = vmatpush.msra.mxu0 0.0
        %554 = vmatpush.msra.mxu0 0.0
        %555 = vmatpush.msra.mxu0 0.0
        %556 = vmatpush.msra.mxu0 0.0
        %557 = vmatpush.msra.mxu0 0.0
        %558 = vmatpush.msra.mxu0 0.0
        %559 = vmatpush.msra.mxu0 0.0
        %560 = vmatpush.msra.mxu0 0.0
        %561 = vmatpush.msra.mxu0 %v290
        %562 = vmatmul.f32.gmra.mxu0 %v544
        %v563 = vpop.f32.mrf.mxu0
        %v564 = vadd.f32 0.0, %v563
        %565 = vdwg.mxu0
        %v567 = vsel %vm312, %v275, 0
        %569 = vmatpush.msra.mxu0 0.0
        %570 = vmatpush.msra.mxu0 0.0
        %571 = vmatpush.msra.mxu0 0.0
        %572 = vmatpush.msra.mxu0 0.0
        %573 = vmatpush.msra.mxu0 0.0
        %574 = vmatpush.msra.mxu0 0.0
        %575 = vmatpush.msra.mxu0 0.0
        %576 = vmatpush.msra.mxu0 0.0
        %577 = vmatpush.msra.mxu0 0.0
        %578 = vmatpush.msra.mxu0 0.0
        %579 = vmatpush.msra.mxu0 0.0
        %580 = vmatpush.msra.mxu0 0.0
        %581 = vmatpush.msra.mxu0 0.0
        %582 = vmatpush.msra.mxu0 0.0
        %583 = vmatpush.msra.mxu0 0.0
        %584 = vmatpush.msra.mxu0 %v291
        %585 = vmatmul.f32.gmra.mxu0 %v567
        %v586 = vpop.f32.mrf.mxu0
        %v587 = vadd.f32 0.0, %v586
        %588 = vdwg.mxu0
        %v590 = vsel %vm312, %v276, 0
        %592 = vmatpush.msra.mxu0 0.0
        %593 = vmatpush.msra.mxu0 0.0
        %594 = vmatpush.msra.mxu0 0.0
        %595 = vmatpush.msra.mxu0 0.0
        %596 = vmatpush.msra.mxu0 0.0
        %597 = vmatpush.msra.mxu0 0.0
        %598 = vmatpush.msra.mxu0 0.0
        %599 = vmatpush.msra.mxu0 0.0
        %600 = vmatpush.msra.mxu0 0.0
        %601 = vmatpush.msra.mxu0 0.0
        %602 = vmatpush.msra.mxu0 0.0
        %603 = vmatpush.msra.mxu0 0.0
        %604 = vmatpush.msra.mxu0 0.0
        %605 = vmatpush.msra.mxu0 0.0
        %606 = vmatpush.msra.mxu0 0.0
        %607 = vmatpush.msra.mxu0 %v292
        %608 = vmatmul.f32.gmra.mxu0 %v590
        %v609 = vpop.f32.mrf.mxu0
        %v610 = vadd.f32 0.0, %v609
        %611 = vdwg.mxu0
        %v613 = vsel %vm312, %v277, 0
        %615 = vmatpush.msra.mxu0 0.0
        %616 = vmatpush.msra.mxu0 0.0
        %617 = vmatpush.msra.mxu0 0.0
        %618 = vmatpush.msra.mxu0 0.0
        %619 = vmatpush.msra.mxu0 0.0
        %620 = vmatpush.msra.mxu0 0.0
        %621 = vmatpush.msra.mxu0 0.0
        %622 = vmatpush.msra.mxu0 0.0
        %623 = vmatpush.msra.mxu0 0.0
        %624 = vmatpush.msra.mxu0 0.0
        %625 = vmatpush.msra.mxu0 0.0
        %626 = vmatpush.msra.mxu0 0.0
        %627 = vmatpush.msra.mxu0 0.0
        %628 = vmatpush.msra.mxu0 0.0
        %629 = vmatpush.msra.mxu0 0.0
        %630 = vmatpush.msra.mxu0 %v293
        %631 = vmatmul.f32.gmra.mxu0 %v613
        %v632 = vpop.f32.mrf.mxu0
        %v633 = vadd.f32 0.0, %v632
        %634 = vdwg.mxu0
        %v636 = vsel %vm312, %v278, 0
        %638 = vmatpush.msra.mxu0 0.0
        %639 = vmatpush.msra.mxu0 0.0
        %640 = vmatpush.msra.mxu0 0.0
        %641 = vmatpush.msra.mxu0 0.0
        %642 = vmatpush.msra.mxu0 0.0
        %643 = vmatpush.msra.mxu0 0.0
        %644 = vmatpush.msra.mxu0 0.0
        %645 = vmatpush.msra.mxu0 0.0
        %646 = vmatpush.msra.mxu0 0.0
        %647 = vmatpush.msra.mxu0 0.0
        %648 = vmatpush.msra.mxu0 0.0
        %649 = vmatpush.msra.mxu0 0.0
        %650 = vmatpush.msra.mxu0 0.0
        %651 = vmatpush.msra.mxu0 0.0
        %652 = vmatpush.msra.mxu0 0.0
        %653 = vmatpush.msra.mxu0 %v294
        %654 = vmatmul.f32.gmra.mxu0 %v636
        %v655 = vpop.f32.mrf.mxu0
        %v656 = vadd.f32 0.0, %v655
        %657 = vdwg.mxu0
        %v659 = vsel %vm312, %v279, 0
        %661 = vmatpush.msra.mxu0 0.0
        %662 = vmatpush.msra.mxu0 0.0
        %663 = vmatpush.msra.mxu0 0.0
        %664 = vmatpush.msra.mxu0 0.0
        %665 = vmatpush.msra.mxu0 0.0
        %666 = vmatpush.msra.mxu0 0.0
        %667 = vmatpush.msra.mxu0 0.0
        %668 = vmatpush.msra.mxu0 0.0
        %669 = vmatpush.msra.mxu0 0.0
        %670 = vmatpush.msra.mxu0 0.0
        %671 = vmatpush.msra.mxu0 0.0
        %672 = vmatpush.msra.mxu0 0.0
        %673 = vmatpush.msra.mxu0 0.0
        %674 = vmatpush.msra.mxu0 0.0
        %675 = vmatpush.msra.mxu0 0.0
        %676 = vmatpush.msra.mxu0 %v295
        %677 = vmatmul.f32.gmra.mxu0 %v659
        %v678 = vpop.f32.mrf.mxu0
        %v679 = vadd.f32 0.0, %v678
        %680 = vdwg.mxu0
        %v681 = vmul.f32 %v334, 0.0625
        %v682 = vmul.f32 %v357, 0.0625
        %v683 = vmul.f32 %v380, 0.0625
        %v684 = vmul.f32 %v403, 0.0625
        %v685 = vmul.f32 %v426, 0.0625
        %v686 = vmul.f32 %v449, 0.0625
        %v687 = vmul.f32 %v472, 0.0625
        %v688 = vmul.f32 %v495, 0.0625
        %v689 = vmul.f32 %v518, 0.0625
        %v690 = vmul.f32 %v541, 0.0625
        %v691 = vmul.f32 %v564, 0.0625
        %v692 = vmul.f32 %v587, 0.0625
        %v693 = vmul.f32 %v610, 0.0625
        %v694 = vmul.f32 %v633, 0.0625
        %v695 = vmul.f32 %v656, 0.0625
        %v696 = vmul.f32 %v679, 0.0625
        %v697 = vadd.f32 %v681, %v682
        %v698 = vadd.f32 %v697, %v683
        %v699 = vadd.f32 %v698, %v684
        %v700 = vadd.f32 %v699, %v685
        %v701 = vadd.f32 %v700, %v686
        %v702 = vadd.f32 %v701, %v687
        %v703 = vadd.f32 %v702, %v688
        %v704 = vadd.f32 %v703, %v689
        %v705 = vadd.f32 %v704, %v690
        %v706 = vadd.f32 %v705, %v691
        %v707 = vadd.f32 %v706, %v692
        %v708 = vadd.f32 %v707, %v693
        %v709 = vadd.f32 %v708, %v694
        %v710 = vadd.f32 %v709, %v695
        %v711 = vadd.f32 %v710, %v696
        %v712 = vmul.f32 %v711, %v711
        %713 = vmatpush.msra.mxu0 %v311
        %714 = vmatpush.msra.mxu0 %v310
        %715 = vmatpush.msra.mxu0 %v309
        %716 = vmatpush.msra.mxu0 %v308
        %717 = vmatpush.msra.mxu0 %v307
        %718 = vmatpush.msra.mxu0 %v306
        %719 = vmatpush.msra.mxu0 %v305
        %720 = vmatpush.msra.mxu0 %v304
        %721 = vmatpush.msra.mxu0 %v303
        %722 = vmatpush.msra.mxu0 %v302
        %723 = vmatpush.msra.mxu0 %v301
        %724 = vmatpush.msra.mxu0 %v300
        %725 = vmatpush.msra.mxu0 %v299
        %726 = vmatpush.msra.mxu0 %v298
        %727 = vmatpush.msra.mxu0 %v297
        %728 = vmatpush.msra.mxu0 %v296
        %729 = vmatmul.f32.gmra.mxu0 %v712
        %v730 = vpop.f32.mrf.mxu0
        %v731 = vadd.f32 0.0, %v730
        %732 = vdwg.mxu0
        %v733 = vrsqrt.pop %v731
        %v734 = vmul.f32 %v733, %v731
        %v735 = vmul.f32 %v734, %v733
        %v736 = vmul.f32 0.5, %v735
        %v737 = vsub.f32 1.5, %v736
        %v738 = vmul.f32 %v733, %v737
        %v739 = vmul.f32 %v731, %v738
        %vm740 = vcmp.eq.f32.partialorder %v731, inf
        %v741 = vsel %vm740, %v731, %v739
        %vm742 = vcmp.eq.f32.partialorder %v731, 0.0
        %v743 = vand.u32 %v731, 2147483648
        %v744 = vsel %vm742, %v743, %v741
        %v745 = vmul.f32 %v711, %v744
        %v746 = vadd.f32 %v731, 1.0
        %v747 = vrcp.pop %v746
        %v748 = vmul.f32 %v746, %v747
        %v749 = vsub.f32 1.0, %v748
        %v750 = vmul.f32 %v747, %v749
        %v751 = vadd.f32 %v747, %v750
        %vm752 = vweird.f32 %v746
        %vm753 = vweird.f32 %v747
        %vm754 = vmor %vm752, %vm753
        %v755 = vsel %vm754, %v747, %v751
        %v756 = vand.u32 2147483647, %v746
        %vm757 = vcmp.eq.f32.partialorder %v756, 8.507059e+37
        %v758 = vand.u32 %v746, 2147483648
        %v759 = vor.u32 1.1754944e-38, %v758
        %v760 = vsel %vm757, %v759, %v755
        %v761 = vmul.f32 %v745, %v760
        %v762 = vmul.f32 %v334, %v761
        %v763 = vmul.f32 %v357, %v761
        %v764 = vmul.f32 %v380, %v761
        %v765 = vmul.f32 %v403, %v761
        %v766 = vmul.f32 %v426, %v761
        %v767 = vmul.f32 %v449, %v761
        %v768 = vmul.f32 %v472, %v761
        %v769 = vmul.f32 %v495, %v761
        %v770 = vmul.f32 %v518, %v761
        %v771 = vmul.f32 %v541, %v761
        %v772 = vmul.f32 %v564, %v761
        %v773 = vmul.f32 %v587, %v761
        %v774 = vmul.f32 %v610, %v761
        %v775 = vmul.f32 %v633, %v761
        %v776 = vmul.f32 %v656, %v761
        %v777 = vmul.f32 %v679, %v761
        %778 = vmatpush.msra.mxu0 %v311
        %779 = vmatpush.msra.mxu0 %v310
        %780 = vmatpush.msra.mxu0 %v309
        %781 = vmatpush.msra.mxu0 %v308
        %782 = vmatpush.msra.mxu0 %v307
        %783 = vmatpush.msra.mxu0 %v306
        %784 = vmatpush.msra.mxu0 %v305
        %785 = vmatpush.msra.mxu0 %v304
        %786 = vmatpush.msra.mxu0 %v303
        %787 = vmatpush.msra.mxu0 %v302
        %788 = vmatpush.msra.mxu0 %v301
        %789 = vmatpush.msra.mxu0 %v300
        %790 = vmatpush.msra.mxu0 %v299
        %791 = vmatpush.msra.mxu0 %v298
        %792 = vmatpush.msra.mxu0 %v297
        %793 = vmatpush.msra.mxu0 %v296
        %794 = vmatmul.f32.gmra.mxu0 %v762
        %v795 = vpop.f32.mrf.mxu0
        %v796 = vadd.f32 0.0, %v795
        %797 = vmatmul.f32.gmra.mxu0 %v763
        %v798 = vpop.f32.mrf.mxu0
        %v799 = vadd.f32 0.0, %v798
        %800 = vmatmul.f32.gmra.mxu0 %v764
        %v801 = vpop.f32.mrf.mxu0
        %v802 = vadd.f32 0.0, %v801
        %803 = vmatmul.f32.gmra.mxu0 %v765
        %v804 = vpop.f32.mrf.mxu0
        %v805 = vadd.f32 0.0, %v804
        %806 = vmatmul.f32.gmra.mxu0 %v766
        %v807 = vpop.f32.mrf.mxu0
        %v808 = vadd.f32 0.0, %v807
        %809 = vmatmul.f32.gmra.mxu0 %v767
        %v810 = vpop.f32.mrf.mxu0
        %v811 = vadd.f32 0.0, %v810
        %812 = vmatmul.f32.gmra.mxu0 %v768
        %v813 = vpop.f32.mrf.mxu0
        %v814 = vadd.f32 0.0, %v813
        %815 = vmatmul.f32.gmra.mxu0 %v769
        %v816 = vpop.f32.mrf.mxu0
        %v817 = vadd.f32 0.0, %v816
        %818 = vmatmul.f32.gmra.mxu0 %v770
        %v819 = vpop.f32.mrf.mxu0
        %v820 = vadd.f32 0.0, %v819
        %821 = vmatmul.f32.gmra.mxu0 %v771
        %v822 = vpop.f32.mrf.mxu0
        %v823 = vadd.f32 0.0, %v822
        %824 = vmatmul.f32.gmra.mxu0 %v772
        %v825 = vpop.f32.mrf.mxu0
        %v826 = vadd.f32 0.0, %v825
        %827 = vmatmul.f32.gmra.mxu0 %v773
        %v828 = vpop.f32.mrf.mxu0
        %v829 = vadd.f32 0.0, %v828
        %830 = vmatmul.f32.gmra.mxu0 %v774
        %v831 = vpop.f32.mrf.mxu0
        %v832 = vadd.f32 0.0, %v831
        %833 = vmatmul.f32.gmra.mxu0 %v775
        %v834 = vpop.f32.mrf.mxu0
        %v835 = vadd.f32 0.0, %v834
        %836 = vmatmul.f32.gmra.mxu0 %v776
        %v837 = vpop.f32.mrf.mxu0
        %v838 = vadd.f32 0.0, %v837
        %839 = vmatmul.f32.gmra.mxu0 %v777
        %v840 = vpop.f32.mrf.mxu0
        %v841 = vadd.f32 0.0, %v840
        %842 = vdwg.mxu0
        %v843 = vadd.f32 %v796, 0.0
        %v844 = vadd.f32 %v799, 0.0
        %v845 = vadd.f32 %v802, 0.0
        %v846 = vadd.f32 %v805, 0.0
        %v847 = vadd.f32 %v808, 0.0
        %v848 = vadd.f32 %v811, 0.0
        %v849 = vadd.f32 %v814, 0.0
        %v850 = vadd.f32 %v817, 0.0
        %v851 = vadd.f32 %v820, 0.0
        %v852 = vadd.f32 %v823, 0.0
        %v853 = vadd.f32 %v826, 0.0
        %v854 = vadd.f32 %v829, 0.0
        %v855 = vadd.f32 %v832, 0.0
        %v856 = vadd.f32 %v835, 0.0
        %v857 = vadd.f32 %v838, 0.0
        %v858 = vadd.f32 %v841, 0.0
        %v859 = vmax.f32 %v843, %v847
        %v860 = vmax.f32 %v844, %v848
        %v861 = vmax.f32 %v845, %v849
        %v862 = vmax.f32 %v846, %v850
        %v863 = vmax.f32 %v859, %v851
        %v864 = vmax.f32 %v860, %v852
        %v865 = vmax.f32 %v861, %v853
        %v866 = vmax.f32 %v862, %v854
        %v867 = vmax.f32 %v863, %v855
        %v868 = vmax.f32 %v864, %v856
        %v869 = vmax.f32 %v865, %v857
        %v870 = vmax.f32 %v866, %v858
        %v871 = vmax.f32 %v867, %v868
        %v872 = vmax.f32 %v869, %v870
        %v873 = vmax.f32 %v871, %v872
        %v874 = vsub.f32 %v843, %v873
        %v875 = vsub.f32 %v844, %v873
        %v876 = vsub.f32 %v845, %v873
        %v877 = vsub.f32 %v846, %v873
        %v878 = vsub.f32 %v847, %v873
        %v879 = vsub.f32 %v848, %v873
        %v880 = vsub.f32 %v849, %v873
        %v881 = vsub.f32 %v850, %v873
        %v882 = vsub.f32 %v851, %v873
        %v883 = vsub.f32 %v852, %v873
        %v884 = vsub.f32 %v853, %v873
        %v885 = vsub.f32 %v854, %v873
        %v886 = vsub.f32 %v855, %v873
        %v887 = vsub.f32 %v856, %v873
        %v888 = vsub.f32 %v857, %v873
        %v889 = vsub.f32 %v858, %v873
        %v890 = vmul.f32 %v874, 1.442695
        %v891 = vpow.pop %v890
        %v892 = vmul.f32 %v875, 1.442695
        %v893 = vpow.pop %v892
        %v894 = vmul.f32 %v876, 1.442695
        %v895 = vpow.pop %v894
        %v896 = vmul.f32 %v877, 1.442695
        %v897 = vpow.pop %v896
        %v898 = vmul.f32 %v878, 1.442695
        %v899 = vpow.pop %v898
        %v900 = vmul.f32 %v879, 1.442695
        %v901 = vpow.pop %v900
        %v902 = vmul.f32 %v880, 1.442695
        %v903 = vpow.pop %v902
        %v904 = vmul.f32 %v881, 1.442695
        %v905 = vpow.pop %v904
        %v906 = vmul.f32 %v882, 1.442695
        %v907 = vpow.pop %v906
        %v908 = vmul.f32 %v883, 1.442695
        %v909 = vpow.pop %v908
        %v910 = vmul.f32 %v884, 1.442695
        %v911 = vpow.pop %v910
        %v912 = vmul.f32 %v885, 1.442695
        %v913 = vpow.pop %v912
        %v914 = vmul.f32 %v886, 1.442695
        %v915 = vpow.pop %v914
        %v916 = vmul.f32 %v887, 1.442695
        %v917 = vpow.pop %v916
        %v918 = vmul.f32 %v888, 1.442695
        %v919 = vpow.pop %v918
        %v920 = vmul.f32 %v889, 1.442695
        %v921 = vpow.pop %v920
        %v922 = vadd.f32 %v891, %v893
        %v923 = vadd.f32 %v922, %v895
        %v924 = vadd.f32 %v923, %v897
        %v925 = vadd.f32 %v924, %v899
        %v926 = vadd.f32 %v925, %v901
        %v927 = vadd.f32 %v926, %v903
        %v928 = vadd.f32 %v927, %v905
        %v929 = vadd.f32 %v928, %v907
        %v930 = vadd.f32 %v929, %v909
        %v931 = vadd.f32 %v930, %v911
        %v932 = vadd.f32 %v931, %v913
        %v933 = vadd.f32 %v932, %v915
        %v934 = vadd.f32 %v933, %v917
        %v935 = vadd.f32 %v934, %v919
        %v936 = vadd.f32 %v935, %v921
        %v937 = vrcp.pop %v936
        %v938 = vmul.f32 %v936, %v937
        %v939 = vsub.f32 1.0, %v938
        %v940 = vmul.f32 %v937, %v939
        %v941 = vadd.f32 %v937, %v940
        %vm942 = vweird.f32 %v936
        %vm943 = vweird.f32 %v937
        %vm944 = vmor %vm942, %vm943
        %v945 = vsel %vm944, %v937, %v941
        %v946 = vand.u32 2147483647, %v936
        %vm947 = vcmp.eq.f32.partialorder %v946, 8.507059e+37
        %v948 = vand.u32 %v936, 2147483648
        %v949 = vor.u32 1.1754944e-38, %v948
        %v950 = vsel %vm947, %v949, %v945
        %v951 = vmul.f32 %v891, %v950
        %v952 = vmul.f32 %v893, %v950
        %v953 = vmul.f32 %v895, %v950
        %v954 = vmul.f32 %v897, %v950
        %v955 = vmul.f32 %v899, %v950
        %v956 = vmul.f32 %v901, %v950
        %v957 = vmul.f32 %v903, %v950
        %v958 = vmul.f32 %v905, %v950
        %v959 = vmul.f32 %v907, %v950
        %v960 = vmul.f32 %v909, %v950
        %v961 = vmul.f32 %v911, %v950
        %v962 = vmul.f32 %v913, %v950
        %v963 = vmul.f32 %v915, %v950
        %v964 = vmul.f32 %v917, %v950
        %v965 = vmul.f32 %v919, %v950
        %v966 = vmul.f32 %v921, %v950
        %v967 = vmul.f32 %v951, %v334
        %v968 = vmul.f32 %v952, %v357
        %v969 = vmul.f32 %v953, %v380
        %v970 = vmul.f32 %v954, %v403
        %v971 = vmul.f32 %v955, %v426
        %v972 = vmul.f32 %v956, %v449
        %v973 = vmul.f32 %v957, %v472
        %v974 = vmul.f32 %v958, %v495
        %v975 = vmul.f32 %v959, %v518
        %v976 = vmul.f32 %v960, %v541
        %v977 = vmul.f32 %v961, %v564
        %v978 = vmul.f32 %v962, %v587
        %v979 = vmul.f32 %v963, %v610
        %v980 = vmul.f32 %v964, %v633
        %v981 = vmul.f32 %v965, %v656
        %v982 = vmul.f32 %v966, %v679
        %v983 = vadd.f32 %v967, %v968
        %v984 = vadd.f32 %v983, %v969
        %v985 = vadd.f32 %v984, %v970
        %v986 = vadd.f32 %v985, %v971
        %v987 = vadd.f32 %v986, %v972
        %v988 = vadd.f32 %v987, %v973
        %v989 = vadd.f32 %v988, %v974
        %v990 = vadd.f32 %v989, %v975
        %v991 = vadd.f32 %v990, %v976
        %v992 = vadd.f32 %v991, %v977
        %v993 = vadd.f32 %v992, %v978
        %v994 = vadd.f32 %v993, %v979
        %v995 = vadd.f32 %v994, %v980
        %v996 = vadd.f32 %v995, %v981
        %v997 = vadd.f32 %v996, %v982
        %v998 = vmul.f32 %v997, %v997
        %999 = vmatpush.msra.mxu0 %v311
        %1000 = vmatpush.msra.mxu0 %v310
        %1001 = vmatpush.msra.mxu0 %v309
        %1002 = vmatpush.msra.mxu0 %v308
        %1003 = vmatpush.msra.mxu0 %v307
        %1004 = vmatpush.msra.mxu0 %v306
        %1005 = vmatpush.msra.mxu0 %v305
        %1006 = vmatpush.msra.mxu0 %v304
        %1007 = vmatpush.msra.mxu0 %v303
        %1008 = vmatpush.msra.mxu0 %v302
        %1009 = vmatpush.msra.mxu0 %v301
        %1010 = vmatpush.msra.mxu0 %v300
        %1011 = vmatpush.msra.mxu0 %v299
        %1012 = vmatpush.msra.mxu0 %v298
        %1013 = vmatpush.msra.mxu0 %v297
        %1014 = vmatpush.msra.mxu0 %v296
        %1015 = vmatmul.f32.gmra.mxu0 %v998
        %v1016 = vpop.f32.mrf.mxu0
        %v1017 = vadd.f32 0.0, %v1016
        %1018 = vdwg.mxu0
        %v1019 = vrsqrt.pop %v1017
        %v1020 = vmul.f32 %v1019, %v1017
        %v1021 = vmul.f32 %v1020, %v1019
        %v1022 = vmul.f32 0.5, %v1021
        %v1023 = vsub.f32 1.5, %v1022
        %v1024 = vmul.f32 %v1019, %v1023
        %v1025 = vmul.f32 %v1017, %v1024
        %vm1026 = vcmp.eq.f32.partialorder %v1017, inf
        %v1027 = vsel %vm1026, %v1017, %v1025
        %vm1028 = vcmp.eq.f32.partialorder %v1017, 0.0
        %v1029 = vand.u32 %v1017, 2147483648
        %v1030 = vsel %vm1028, %v1029, %v1027
        %v1031 = vmul.f32 %v997, %v1030
        %v1032 = vadd.f32 %v1017, 1.0
        %v1033 = vrcp.pop %v1032
        %v1034 = vmul.f32 %v1032, %v1033
        %v1035 = vsub.f32 1.0, %v1034
        %v1036 = vmul.f32 %v1033, %v1035
        %v1037 = vadd.f32 %v1033, %v1036
        %vm1038 = vweird.f32 %v1032
        %vm1039 = vweird.f32 %v1033
        %vm1040 = vmor %vm1038, %vm1039
        %v1041 = vsel %vm1040, %v1033, %v1037
        %v1042 = vand.u32 2147483647, %v1032
        %vm1043 = vcmp.eq.f32.partialorder %v1042, 8.507059e+37
        %v1044 = vand.u32 %v1032, 2147483648
        %v1045 = vor.u32 1.1754944e-38, %v1044
        %v1046 = vsel %vm1043, %v1045, %v1041
        %v1047 = vmul.f32 %v1031, %v1046
        %v1048 = vmul.f32 %v334, %v1047
        %v1049 = vmul.f32 %v357, %v1047
        %v1050 = vmul.f32 %v380, %v1047
        %v1051 = vmul.f32 %v403, %v1047
        %v1052 = vmul.f32 %v426, %v1047
        %v1053 = vmul.f32 %v449, %v1047
        %v1054 = vmul.f32 %v472, %v1047
        %v1055 = vmul.f32 %v495, %v1047
        %v1056 = vmul.f32 %v518, %v1047
        %v1057 = vmul.f32 %v541, %v1047
        %v1058 = vmul.f32 %v564, %v1047
        %v1059 = vmul.f32 %v587, %v1047
        %v1060 = vmul.f32 %v610, %v1047
        %v1061 = vmul.f32 %v633, %v1047
        %v1062 = vmul.f32 %v656, %v1047
        %v1063 = vmul.f32 %v679, %v1047
        %1064 = vmatpush.msra.mxu0 %v311
        %1065 = vmatpush.msra.mxu0 %v310
        %1066 = vmatpush.msra.mxu0 %v309
        %1067 = vmatpush.msra.mxu0 %v308
        %1068 = vmatpush.msra.mxu0 %v307
        %1069 = vmatpush.msra.mxu0 %v306
        %1070 = vmatpush.msra.mxu0 %v305
        %1071 = vmatpush.msra.mxu0 %v304
        %1072 = vmatpush.msra.mxu0 %v303
        %1073 = vmatpush.msra.mxu0 %v302
        %1074 = vmatpush.msra.mxu0 %v301
        %1075 = vmatpush.msra.mxu0 %v300
        %1076 = vmatpush.msra.mxu0 %v299
        %1077 = vmatpush.msra.mxu0 %v298
        %1078 = vmatpush.msra.mxu0 %v297
        %1079 = vmatpush.msra.mxu0 %v296
        %1080 = vmatmul.f32.gmra.mxu0 %v1048
        %v1081 = vpop.f32.mrf.mxu0
        %v1082 = vadd.f32 0.0, %v1081
        %1083 = vmatmul.f32.gmra.mxu0 %v1049
        %v1084 = vpop.f32.mrf.mxu0
        %v1085 = vadd.f32 0.0, %v1084
        %1086 = vmatmul.f32.gmra.mxu0 %v1050
        %v1087 = vpop.f32.mrf.mxu0
        %v1088 = vadd.f32 0.0, %v1087
        %1089 = vmatmul.f32.gmra.mxu0 %v1051
        %v1090 = vpop.f32.mrf.mxu0
        %v1091 = vadd.f32 0.0, %v1090
        %1092 = vmatmul.f32.gmra.mxu0 %v1052
        %v1093 = vpop.f32.mrf.mxu0
        %v1094 = vadd.f32 0.0, %v1093
        %1095 = vmatmul.f32.gmra.mxu0 %v1053
        %v1096 = vpop.f32.mrf.mxu0
        %v1097 = vadd.f32 0.0, %v1096
        %1098 = vmatmul.f32.gmra.mxu0 %v1054
        %v1099 = vpop.f32.mrf.mxu0
        %v1100 = vadd.f32 0.0, %v1099
        %1101 = vmatmul.f32.gmra.mxu0 %v1055
        %v1102 = vpop.f32.mrf.mxu0
        %v1103 = vadd.f32 0.0, %v1102
        %1104 = vmatmul.f32.gmra.mxu0 %v1056
        %v1105 = vpop.f32.mrf.mxu0
        %v1106 = vadd.f32 0.0, %v1105
        %1107 = vmatmul.f32.gmra.mxu0 %v1057
        %v1108 = vpop.f32.mrf.mxu0
        %v1109 = vadd.f32 0.0, %v1108
        %1110 = vmatmul.f32.gmra.mxu0 %v1058
        %v1111 = vpop.f32.mrf.mxu0
        %v1112 = vadd.f32 0.0, %v1111
        %1113 = vmatmul.f32.gmra.mxu0 %v1059
        %v1114 = vpop.f32.mrf.mxu0
        %v1115 = vadd.f32 0.0, %v1114
        %1116 = vmatmul.f32.gmra.mxu0 %v1060
        %v1117 = vpop.f32.mrf.mxu0
        %v1118 = vadd.f32 0.0, %v1117
        %1119 = vmatmul.f32.gmra.mxu0 %v1061
        %v1120 = vpop.f32.mrf.mxu0
        %v1121 = vadd.f32 0.0, %v1120
        %1122 = vmatmul.f32.gmra.mxu0 %v1062
        %v1123 = vpop.f32.mrf.mxu0
        %v1124 = vadd.f32 0.0, %v1123
        %1125 = vmatmul.f32.gmra.mxu0 %v1063
        %v1126 = vpop.f32.mrf.mxu0
        %v1127 = vadd.f32 0.0, %v1126
        %1128 = vdwg.mxu0
        %v1129 = vadd.f32 %v843, %v1082
        %v1130 = vadd.f32 %v844, %v1085
        %v1131 = vadd.f32 %v845, %v1088
        %v1132 = vadd.f32 %v846, %v1091
        %v1133 = vadd.f32 %v847, %v1094
        %v1134 = vadd.f32 %v848, %v1097
        %v1135 = vadd.f32 %v849, %v1100
        %v1136 = vadd.f32 %v850, %v1103
        %v1137 = vadd.f32 %v851, %v1106
        %v1138 = vadd.f32 %v852, %v1109
        %v1139 = vadd.f32 %v853, %v1112
        %v1140 = vadd.f32 %v854, %v1115
        %v1141 = vadd.f32 %v855, %v1118
        %v1142 = vadd.f32 %v856, %v1121
        %v1143 = vadd.f32 %v857, %v1124
        %v1144 = vadd.f32 %v858, %v1127
        %v1145 = vmax.f32 %v1129, %v1133
        %v1146 = vmax.f32 %v1130, %v1134
        %v1147 = vmax.f32 %v1131, %v1135
        %v1148 = vmax.f32 %v1132, %v1136
        %v1149 = vmax.f32 %v1145, %v1137
        %v1150 = vmax.f32 %v1146, %v1138
        %v1151 = vmax.f32 %v1147, %v1139
        %v1152 = vmax.f32 %v1148, %v1140
        %v1153 = vmax.f32 %v1149, %v1141
        %v1154 = vmax.f32 %v1150, %v1142
        %v1155 = vmax.f32 %v1151, %v1143
        %v1156 = vmax.f32 %v1152, %v1144
        %v1157 = vmax.f32 %v1153, %v1154
        %v1158 = vmax.f32 %v1155, %v1156
        %v1159 = vmax.f32 %v1157, %v1158
        %v1160 = vsub.f32 %v1129, %v1159
        %v1161 = vsub.f32 %v1130, %v1159
        %v1162 = vsub.f32 %v1131, %v1159
        %v1163 = vsub.f32 %v1132, %v1159
        %v1164 = vsub.f32 %v1133, %v1159
        %v1165 = vsub.f32 %v1134, %v1159
        %v1166 = vsub.f32 %v1135, %v1159
        %v1167 = vsub.f32 %v1136, %v1159
        %v1168 = vsub.f32 %v1137, %v1159
        %v1169 = vsub.f32 %v1138, %v1159
        %v1170 = vsub.f32 %v1139, %v1159
        %v1171 = vsub.f32 %v1140, %v1159
        %v1172 = vsub.f32 %v1141, %v1159
        %v1173 = vsub.f32 %v1142, %v1159
        %v1174 = vsub.f32 %v1143, %v1159
        %v1175 = vsub.f32 %v1144, %v1159
        %v1176 = vmul.f32 %v1160, 1.442695
        %v1177 = vpow.pop %v1176
        %v1178 = vmul.f32 %v1161, 1.442695
        %v1179 = vpow.pop %v1178
        %v1180 = vmul.f32 %v1162, 1.442695
        %v1181 = vpow.pop %v1180
        %v1182 = vmul.f32 %v1163, 1.442695
        %v1183 = vpow.pop %v1182
        %v1184 = vmul.f32 %v1164, 1.442695
        %v1185 = vpow.pop %v1184
        %v1186 = vmul.f32 %v1165, 1.442695
        %v1187 = vpow.pop %v1186
        %v1188 = vmul.f32 %v1166, 1.442695
        %v1189 = vpow.pop %v1188
        %v1190 = vmul.f32 %v1167, 1.442695
        %v1191 = vpow.pop %v1190
        %v1192 = vmul.f32 %v1168, 1.442695
        %v1193 = vpow.pop %v1192
        %v1194 = vmul.f32 %v1169, 1.442695
        %v1195 = vpow.pop %v1194
        %v1196 = vmul.f32 %v1170, 1.442695
        %v1197 = vpow.pop %v1196
        %v1198 = vmul.f32 %v1171, 1.442695
        %v1199 = vpow.pop %v1198
        %v1200 = vmul.f32 %v1172, 1.442695
        %v1201 = vpow.pop %v1200
        %v1202 = vmul.f32 %v1173, 1.442695
        %v1203 = vpow.pop %v1202
        %v1204 = vmul.f32 %v1174, 1.442695
        %v1205 = vpow.pop %v1204
        %v1206 = vmul.f32 %v1175, 1.442695
        %v1207 = vpow.pop %v1206
        %v1208 = vadd.f32 %v1177, %v1179
        %v1209 = vadd.f32 %v1208, %v1181
        %v1210 = vadd.f32 %v1209, %v1183
        %v1211 = vadd.f32 %v1210, %v1185
        %v1212 = vadd.f32 %v1211, %v1187
        %v1213 = vadd.f32 %v1212, %v1189
        %v1214 = vadd.f32 %v1213, %v1191
        %v1215 = vadd.f32 %v1214, %v1193
        %v1216 = vadd.f32 %v1215, %v1195
        %v1217 = vadd.f32 %v1216, %v1197
        %v1218 = vadd.f32 %v1217, %v1199
        %v1219 = vadd.f32 %v1218, %v1201
        %v1220 = vadd.f32 %v1219, %v1203
        %v1221 = vadd.f32 %v1220, %v1205
        %v1222 = vadd.f32 %v1221, %v1207
        %v1223 = vrcp.pop %v1222
        %v1224 = vmul.f32 %v1222, %v1223
        %v1225 = vsub.f32 1.0, %v1224
        %v1226 = vmul.f32 %v1223, %v1225
        %v1227 = vadd.f32 %v1223, %v1226
        %vm1228 = vweird.f32 %v1222
        %vm1229 = vweird.f32 %v1223
        %vm1230 = vmor %vm1228, %vm1229
        %v1231 = vsel %vm1230, %v1223, %v1227
        %v1232 = vand.u32 2147483647, %v1222
        %vm1233 = vcmp.eq.f32.partialorder %v1232, 8.507059e+37
        %v1234 = vand.u32 %v1222, 2147483648
        %v1235 = vor.u32 1.1754944e-38, %v1234
        %v1236 = vsel %vm1233, %v1235, %v1231
        %v1237 = vmul.f32 %v1177, %v1236
        %v1238 = vmul.f32 %v1179, %v1236
        %v1239 = vmul.f32 %v1181, %v1236
        %v1240 = vmul.f32 %v1183, %v1236
        %v1241 = vmul.f32 %v1185, %v1236
        %v1242 = vmul.f32 %v1187, %v1236
        %v1243 = vmul.f32 %v1189, %v1236
        %v1244 = vmul.f32 %v1191, %v1236
        %v1245 = vmul.f32 %v1193, %v1236
        %v1246 = vmul.f32 %v1195, %v1236
        %v1247 = vmul.f32 %v1197, %v1236
        %v1248 = vmul.f32 %v1199, %v1236
        %v1249 = vmul.f32 %v1201, %v1236
        %v1250 = vmul.f32 %v1203, %v1236
        %v1251 = vmul.f32 %v1205, %v1236
        %v1252 = vmul.f32 %v1207, %v1236
        %v1253 = vmul.f32 %v1237, %v334
        %v1254 = vmul.f32 %v1238, %v357
        %v1255 = vmul.f32 %v1239, %v380
        %v1256 = vmul.f32 %v1240, %v403
        %v1257 = vmul.f32 %v1241, %v426
        %v1258 = vmul.f32 %v1242, %v449
        %v1259 = vmul.f32 %v1243, %v472
        %v1260 = vmul.f32 %v1244, %v495
        %v1261 = vmul.f32 %v1245, %v518
        %v1262 = vmul.f32 %v1246, %v541
        %v1263 = vmul.f32 %v1247, %v564
        %v1264 = vmul.f32 %v1248, %v587
        %v1265 = vmul.f32 %v1249, %v610
        %v1266 = vmul.f32 %v1250, %v633
        %v1267 = vmul.f32 %v1251, %v656
        %v1268 = vmul.f32 %v1252, %v679
        %v1269 = vadd.f32 %v1253, %v1254
        %v1270 = vadd.f32 %v1269, %v1255
        %v1271 = vadd.f32 %v1270, %v1256
        %v1272 = vadd.f32 %v1271, %v1257
        %v1273 = vadd.f32 %v1272, %v1258
        %v1274 = vadd.f32 %v1273, %v1259
        %v1275 = vadd.f32 %v1274, %v1260
        %v1276 = vadd.f32 %v1275, %v1261
        %v1277 = vadd.f32 %v1276, %v1262
        %v1278 = vadd.f32 %v1277, %v1263
        %v1279 = vadd.f32 %v1278, %v1264
        %v1280 = vadd.f32 %v1279, %v1265
        %v1281 = vadd.f32 %v1280, %v1266
        %v1282 = vadd.f32 %v1281, %v1267
        %v1283 = vadd.f32 %v1282, %v1268
        %v1284 = vmul.f32 %v1283, %v1283
        %1285 = vmatpush.msra.mxu0 %v311
        %1286 = vmatpush.msra.mxu0 %v310
        %1287 = vmatpush.msra.mxu0 %v309
        %1288 = vmatpush.msra.mxu0 %v308
        %1289 = vmatpush.msra.mxu0 %v307
        %1290 = vmatpush.msra.mxu0 %v306
        %1291 = vmatpush.msra.mxu0 %v305
        %1292 = vmatpush.msra.mxu0 %v304
        %1293 = vmatpush.msra.mxu0 %v303
        %1294 = vmatpush.msra.mxu0 %v302
        %1295 = vmatpush.msra.mxu0 %v301
        %1296 = vmatpush.msra.mxu0 %v300
        %1297 = vmatpush.msra.mxu0 %v299
        %1298 = vmatpush.msra.mxu0 %v298
        %1299 = vmatpush.msra.mxu0 %v297
        %1300 = vmatpush.msra.mxu0 %v296
        %1301 = vmatmul.f32.gmra.mxu0 %v1284
        %v1302 = vpop.f32.mrf.mxu0
        %v1303 = vadd.f32 0.0, %v1302
        %1304 = vdwg.mxu0
        %v1305 = vrsqrt.pop %v1303
        %v1306 = vmul.f32 %v1305, %v1303
        %v1307 = vmul.f32 %v1306, %v1305
        %v1308 = vmul.f32 0.5, %v1307
        %v1309 = vsub.f32 1.5, %v1308
        %v1310 = vmul.f32 %v1305, %v1309
        %v1311 = vmul.f32 %v1303, %v1310
        %vm1312 = vcmp.eq.f32.partialorder %v1303, inf
        %v1313 = vsel %vm1312, %v1303, %v1311
        %vm1314 = vcmp.eq.f32.partialorder %v1303, 0.0
        %v1315 = vand.u32 %v1303, 2147483648
        %v1316 = vsel %vm1314, %v1315, %v1313
        %v1317 = vmul.f32 %v1283, %v1316
        %v1318 = vadd.f32 %v1303, 1.0
        %v1319 = vrcp.pop %v1318
        %v1320 = vmul.f32 %v1318, %v1319
        %v1321 = vsub.f32 1.0, %v1320
        %v1322 = vmul.f32 %v1319, %v1321
        %v1323 = vadd.f32 %v1319, %v1322
        %vm1324 = vweird.f32 %v1318
        %vm1325 = vweird.f32 %v1319
        %vm1326 = vmor %vm1324, %vm1325
        %v1327 = vsel %vm1326, %v1319, %v1323
        %v1328 = vand.u32 2147483647, %v1318
        %vm1329 = vcmp.eq.f32.partialorder %v1328, 8.507059e+37
        %v1330 = vand.u32 %v1318, 2147483648
        %v1331 = vor.u32 1.1754944e-38, %v1330
        %v1332 = vsel %vm1329, %v1331, %v1327
        %v1333 = vmul.f32 %v1317, %v1332
        %1334 = vst [vmem:[%s263] sm:$0xff] %v1333
        %s1335 = sand.u32 %s93, 1
        %s1336 = scalar_lea.sflag [#allocation4], %s1335
        %s1337 = sand.u32 %s93, 1
        %s1338 = smul.addr %s1337, 8
        %s1339 = scalar_lea.vmem [#allocation3], %s1338
        // Predicated region
        $region71: #{tpu_custom_call.1} parent=65 // pred_check
          %p1340 = pneg %p103
        $region72: #{tpu_custom_call.1} parent=65 // pred_check_branch
          %1342 = sbr.rel (%p1340) target = $region74
        $region73: #{tpu_custom_call.1} parent=65 // pred_region
          %1344 = vsyncadd %s1336, 0
          %s1345 = smul.addr %s17, 8
          %s1346 = scalar_lea.hbm %s3, %s1345
          %s1348 = sshll.u32 %s1339, 4
          %s1349 = int_to_ptr.vmem [resolvable:$true] %s1348
          %s1350 = sshll.u32 %s1346, 4
          %s1351 = int_to_ptr.hbm [resolvable:$true] %s1350
          %1353 = dma.vmem_to_hbm [thread:$0]  %s1349, 128, %s1351, %s1336
        $region74: #{tpu_custom_call.1} parent=65 // pred_fallthru
          _
      $region66: #{tpu_custom_call.1} parent=5 // pred_fallthru
        _
      %p1354 = scmp.le.s32.totalorder 2, %s12
      // Predicated region
      $region75: #{tpu_custom_call.1} parent=5 // pred_check
        %p1355 = pneg %p1354
      $region76: #{tpu_custom_call.1} parent=5 // pred_check_branch
        %1357 = sbr.rel (%p1355) target = $region78
      $region77: #{tpu_custom_call.1} parent=5 // pred_region
        %s1358 = ssub.s32 %s12, 2
        // Predicated region
        $region79: #{tpu_custom_call.1} parent=77 // pred_check
          %p1359 = pneg %p109
        $region80: #{tpu_custom_call.1} parent=77 // pred_check_branch
          %1361 = sbr.rel (%p1359) target = $region82
        $region81: #{tpu_custom_call.1} parent=77 // pred_region
          %s1362 = sand.u32 %s94, 1
          %s1363 = scalar_lea.sflag [#allocation4], %s1362
          %s1364 = sand.u32 %s94, 1
          %s1365 = smul.addr %s1364, 8
          %s1366 = scalar_lea.vmem [#allocation3], %s1365
          %1368 = dma.done %s1363, 128
        $region82: #{tpu_custom_call.1} parent=77 // pred_fallthru
          _
      $region78: #{tpu_custom_call.1} parent=5 // pred_fallthru
        _
    $region6: #{tpu_custom_call.1} parent=1 // loop_footer
      %s16 = sadd.s32 1, %s12
    $region7: #{tpu_custom_call.1} parent=1 // loop_footer_branch
      %11 = sbr.rel target = $region3
    $region8: #{tpu_custom_call.1} parent=1 // loop_exit
      _
    %1369 = vsyncpa [#allocation4], 1
    %s1370 = scalar_lea.sflag [#allocation4], 1
    %1371 = vsyncpa %s1370, 1

</llo_original>
